<compile_context>
chip_gen: v6e
topology: v6e:2x2x1
jax: 0.10.0
libtpu: 0.0.40
codegen_flags: <defaults>
</compile_context>

<pallas_src>
import jax
import jax.numpy as jnp
from jax.experimental import pallas as pl
from jax.experimental.pallas import tpu as pltpu


# -----------------------------------------------------------------------------
# Pallas kernel: grid=(T,), weights VMEM-resident, hidden carried in scratch.
# refs = (x_emb, h0, gate_w, gate_b, fc, pred_out, hidden_out, h_scratch)
# -----------------------------------------------------------------------------
def _gru_decoder_kernel(x_ref, h0_ref, gw_ref, gb_ref, fc_ref,
                        pred_ref, h_out_ref, h_scr):
    t = pl.program_id(0)
    nr_layers, gw_rows, three_h = gw_ref.shape
    H = three_h // 3
    in_max = gw_rows - H
    E = x_ref.shape[2]

    # Load initial hidden into the VMEM carry once.
    @pl.when(t == 0)
    def _init():
        h_scr[...] = h0_ref[...]

    x = x_ref[0]                                                  # (B, E) bf16
    for layer in range(nr_layers):                                # static unroll
        h_prev = h_scr[layer]                                     # (B, H) f32
        k_in = E if layer == 0 else H                             # static

        # Fused gate projections, gates packed [r|z|n] on the lane axis.
        gi = jnp.dot(x, gw_ref[layer, 0:k_in, :],
                     preferred_element_type=jnp.float32) + gb_ref[layer, 0:1, :]
        gh = jnp.dot(h_prev.astype(jnp.bfloat16),
                     gw_ref[layer, in_max:in_max + H, :],
                     preferred_element_type=jnp.float32) + gb_ref[layer, 1:2, :]

        # Gate math in f32 on the VPU/EUP.  NOTE: shuffle-free only because H
        # is a multiple of 128 (pad each gate to 128 lanes otherwise).
        r = jax.nn.sigmoid(gi[:, 0 * H:1 * H] + gh[:, 0 * H:1 * H])
        z = jax.nn.sigmoid(gi[:, 1 * H:2 * H] + gh[:, 1 * H:2 * H])
        n = jnp.tanh(gi[:, 2 * H:3 * H] + r * gh[:, 2 * H:3 * H])
        h_new = (1.0 - z) * n + z * h_prev

        h_scr[layer] = h_new
        x = h_new.astype(jnp.bfloat16)                            # next layer input

    # Final linear: fc weight^T is rows [0:H], bias is row H of the packed slab.
    pred = jnp.dot(x, fc_ref[0:H, :], preferred_element_type=jnp.float32) \
        + fc_ref[H:H + 1, :].astype(jnp.float32)
    pred_ref[0] = pred

    # Write the hidden state back to HBM only once, at the last step.
    @pl.when(t == pl.num_programs(0) - 1)
    def _finalize():
        h_out_ref[...] = h_scr[...]


# -----------------------------------------------------------------------------
# Parameter handling
# -----------------------------------------------------------------------------
def init_params(key, input_size, embedding_size, hidden_size, output_size, nr_layers):
    """PyTorch-layout parameters (same layout as nn.Embedding / nn.GRU / nn.Linear)."""
    params = {}
    k_emb, key = jax.random.split(key)
    params["embedding"] = jax.random.normal(
        k_emb, (input_size, embedding_size), jnp.float32)

    bound = hidden_size ** -0.5
    for layer in range(nr_layers):
        in_dim = embedding_size if layer == 0 else hidden_size
        k1, k2, k3, k4, key = jax.random.split(key, 5)
        params[f"weight_ih_l{layer}"] = jax.random.uniform(
            k1, (3 * hidden_size, in_dim), jnp.float32, -bound, bound)
        params[f"weight_hh_l{layer}"] = jax.random.uniform(
            k2, (3 * hidden_size, hidden_size), jnp.float32, -bound, bound)
        params[f"bias_ih_l{layer}"] = jax.random.uniform(
            k3, (3 * hidden_size,), jnp.float32, -bound, bound)
        params[f"bias_hh_l{layer}"] = jax.random.uniform(
            k4, (3 * hidden_size,), jnp.float32, -bound, bound)

    k5, k6, _ = jax.random.split(key, 3)
    params["fc_weight"] = jax.random.uniform(
        k5, (output_size, hidden_size), jnp.float32, -bound, bound)
    params["fc_bias"] = jax.random.uniform(
        k6, (output_size,), jnp.float32, -bound, bound)
    return params


def pack_params(params, nr_layers):
    """Pre-transpose / fuse / pack PyTorch-layout params into lane-dense bf16 slabs."""
    E = params["embedding"].shape[1]
    H = params["weight_hh_l0"].shape[1]
    in_max = max(E, H)

    gw_layers, gb_layers = [], []
    for layer in range(nr_layers):
        w_ih_t = params[f"weight_ih_l{layer}"].T                  # (in_dim, 3H)
        pad = in_max - w_ih_t.shape[0]
        if pad:
            w_ih_t = jnp.pad(w_ih_t, ((0, pad), (0, 0)))
        w_hh_t = params[f"weight_hh_l{layer}"].T                  # (H, 3H)
        gw_layers.append(jnp.concatenate([w_ih_t, w_hh_t], axis=0))   # (in_max+H, 3H)
        gb_layers.append(jnp.stack([params[f"bias_ih_l{layer}"],
                                    params[f"bias_hh_l{layer}"]]))    # (2, 3H)

    fc_packed = jnp.concatenate(
        [params["fc_weight"].T, params["fc_bias"][None, :]], axis=0)   # (H+1, O)

    return {
        "emb": params["embedding"].astype(jnp.bfloat16),          # (V, E)
        "gw": jnp.stack(gw_layers).astype(jnp.bfloat16),          # (L, in_max+H, 3H)
        "gb": jnp.stack(gb_layers).astype(jnp.float32),           # (L, 2, 3H)
        "fc": fc_packed.astype(jnp.bfloat16),                     # (H+1, O)
    }


# -----------------------------------------------------------------------------
# Wrappers
# -----------------------------------------------------------------------------
def _decode_pallas(x_emb, hidden, gw, gb, fc):
    """x_emb: (T, B, E) bf16, hidden: (L, B, H) f32 -> (preds (T,B,O), hidden)."""
    T, B, E = x_emb.shape
    L, _, H = hidden.shape
    O = fc.shape[1]

    grid_spec = pltpu.PrefetchScalarGridSpec(
        num_scalar_prefetch=0,
        grid=(T,),
        in_specs=[
            # Per-step activation block (pipelined, tiny).
            pl.BlockSpec((1, B, E), lambda t: (t, 0, 0)),
            # Everything below has a constant index_map: DMA'd once, VMEM-resident.
            pl.BlockSpec((L, B, H), lambda t: (0, 0, 0)),
            pl.BlockSpec(gw.shape, lambda t: (0, 0, 0)),
            pl.BlockSpec(gb.shape, lambda t: (0, 0, 0)),
            pl.BlockSpec(fc.shape, lambda t: (0, 0)),
        ],
        out_specs=(
            pl.BlockSpec((1, B, O), lambda t: (t, 0, 0)),
            pl.BlockSpec((L, B, H), lambda t: (0, 0, 0)),
        ),
        scratch_shapes=[pltpu.VMEM((L, B, H), jnp.float32)],
    )

    preds, h_out = pl.pallas_call(
        _gru_decoder_kernel,
        grid_spec=grid_spec,
        out_shape=(
            jax.ShapeDtypeStruct((T, B, O), jnp.float32),
            jax.ShapeDtypeStruct((L, B, H), jnp.float32),
        ),
        compiler_params=pltpu.CompilerParams(
            dimension_semantics=("arbitrary",)),   # steps carry hidden -> sequential
    )(x_emb, hidden, gw, gb, fc)
    return preds, h_out


def gru_decoder_decode(tokens, hidden, packed):
    """Fused T-step decode. tokens: (T, B) int32, hidden: (L, B, H)."""
    # Embedding gather outside the kernel; nn.Dropout is identity in eval mode.
    x_emb = jnp.take(packed["emb"], tokens, axis=0)               # (T, B, E) bf16
    return _decode_pallas(x_emb, hidden, packed["gw"], packed["gb"], packed["fc"])


def gru_decoder_forward(index_vector, hidden, packed):
    """Module forward (single step). index_vector: (B,), hidden: (L, B, H)."""
    preds, h_out = gru_decoder_decode(
        index_vector[None, :].astype(jnp.int32), hidden, packed)
    return preds[0], h_out


gru_decoder_step = jax.jit(gru_decoder_forward)
gru_decoder_decode_fused = jax.jit(gru_decoder_decode)


# -----------------------------------------------------------------------------
# Pure-JAX reference (PyTorch-layout params) for correctness check
# -----------------------------------------------------------------------------
def gru_decoder_reference(index_vector, hidden, params, nr_layers):
    hp = jax.lax.Precision.HIGHEST
    x = params["embedding"][index_vector]                         # (B, E)
    new_h = []
    for layer in range(nr_layers):
        w_ih = params[f"weight_ih_l{layer}"]
        w_hh = params[f"weight_hh_l{layer}"]
        b_ih = params[f"bias_ih_l{layer}"]
        b_hh = params[f"bias_hh_l{layer}"]
        H = w_hh.shape[1]
        h_prev = hidden[layer]
        gi = jnp.dot(x, w_ih.T, precision=hp) + b_ih
        gh = jnp.dot(h_prev, w_hh.T, precision=hp) + b_hh
        r = jax.nn.sigmoid(gi[:, :H] + gh[:, :H])
        z = jax.nn.sigmoid(gi[:, H:2 * H] + gh[:, H:2 * H])
        n = jnp.tanh(gi[:, 2 * H:] + r * gh[:, 2 * H:])
        h_new = (1.0 - z) * n + z * h_prev
        new_h.append(h_new)
        x = h_new
    pred = jnp.dot(x, params["fc_weight"].T, precision=hp) + params["fc_bias"]
    return pred, jnp.stack(new_h)


if __name__ == "__main__":
    # Small, lane-aligned shapes (last dims multiples of 128, batch = 8 sublanes).
    input_size = 16        # vocab
    embedding_size = 128
    hidden_size = 128
    output_size = 128
    nr_layers = 2
    batch = 8              # NOTE: real deployments should stack decode streams
                           # toward 128/256 rows to fill the MXU.
    T = 4                  # fused decode steps for the multi-step check
    # dropout p=0.1 is identity in eval mode.

    key = jax.random.PRNGKey(0)
    k_params, k_idx, k_hid = jax.random.split(key, 3)

    params = init_params(
        k_params, input_size, embedding_size, hidden_size, output_size, nr_layers)
    packed = pack_params(params, nr_layers)

    tokens = jax.random.randint(k_idx, (T, batch), 0, input_size, jnp.int32)
    hidden = jax.random.normal(k_hid, (nr_layers, batch, hidden_size), jnp.float32)

    # --- single-step check (the module's forward) -------------------------------
    pred_ref, hid_ref = gru_decoder_reference(tokens[0], hidden, params, nr_layers)
    predictions, new_hidden = gru_decoder_step(tokens[0], hidden, packed)
    jax.block_until_ready((predictions, new_hidden))

    assert predictions.shape == (batch, output_size)
    assert new_hidden.shape == (nr_layers, batch, hidden_size)
    # bf16 matmul operands vs f32 HIGHEST reference -> loose tolerance.
    assert jnp.allclose(predictions, pred_ref, atol=5e-2, rtol=5e-2)
    assert jnp.allclose(new_hidden, hid_ref, atol=5e-2, rtol=5e-2)

    # --- fused multi-step check vs sequential single-step reference -------------
    h_r = hidden
    preds_r = []
    for t in range(T):
        p_r, h_r = gru_decoder_reference(tokens[t], h_r, params, nr_layers)
        preds_r.append(p_r)
    preds_r = jnp.stack(preds_r)

    preds, h_fin = gru_decoder_decode_fused(tokens, hidden, packed)
    jax.block_until_ready((preds, h_fin))

    assert preds.shape == (T, batch, output_size)
    assert h_fin.shape == (nr_layers, batch, hidden_size)
    assert jnp.allclose(preds, preds_r, atol=5e-2, rtol=5e-2)
    assert jnp.allclose(h_fin, h_r, atol=5e-2, rtol=5e-2)

    print("KERNEL_OK")
</pallas_src>

<mosaic_0001>
module attributes {stable_mosaic.version = 11 : i64} {
  func.func @_gru_decoder_kernel(%arg0: i32, %arg1: memref<1x8x128xbf16, #tpu.memory_space<vmem>>, %arg2: memref<2x8x128xf32, #tpu.memory_space<vmem>>, %arg3: memref<2x256x384xbf16, #tpu.memory_space<vmem>>, %arg4: memref<2x2x384xf32, #tpu.memory_space<vmem>>, %arg5: memref<129x128xbf16, #tpu.memory_space<vmem>>, %arg6: memref<1x8x128xf32, #tpu.memory_space<vmem>>, %arg7: memref<2x8x128xf32, #tpu.memory_space<vmem>>, %arg8: memref<2x8x128xf32, #tpu.memory_space<vmem>>) attributes {dimension_semantics = [#tpu.dimension_semantics<arbitrary>], iteration_bounds = array<i64: 1>, scalar_prefetch = 0 : i64, scratch_operands = 1 : i64, tpu.core_type = #tpu.core_type<tc>, window_params = [{transform_indices = @transform_0, window_bounds = array<i64: 1, 8, 128>}, {pipeline_mode = #tpu.pipeline_mode<synchronous>, transform_indices = @transform_1, window_bounds = array<i64: 2, 8, 128>}, {pipeline_mode = #tpu.pipeline_mode<synchronous>, transform_indices = @transform_2, window_bounds = array<i64: 2, 256, 384>}, {pipeline_mode = #tpu.pipeline_mode<synchronous>, transform_indices = @transform_3, window_bounds = array<i64: 2, 2, 384>}, {pipeline_mode = #tpu.pipeline_mode<synchronous>, transform_indices = @transform_4, window_bounds = array<i64: 129, 128>}, {transform_indices = @transform_5, window_bounds = array<i64: 1, 8, 128>}, {pipeline_mode = #tpu.pipeline_mode<synchronous>, transform_indices = @transform_6, window_bounds = array<i64: 2, 8, 128>}]} {
    %c0_i32 = arith.constant 0 : i32
    %0 = arith.cmpi eq, %arg0, %c0_i32 : i32
    %1 = arith.extui %0 : i1 to i32
    %c0_i32_0 = arith.constant 0 : i32
    %2 = arith.cmpi ne, %1, %c0_i32_0 : i32
    scf.if %2 {
      %c0_56 = arith.constant 0 : index
      %c0_57 = arith.constant 0 : index
      %c0_58 = arith.constant 0 : index
      %111 = vector.load %arg2[%c0_56, %c0_57, %c0_58] : memref<2x8x128xf32, #tpu.memory_space<vmem>>, vector<2x8x128xf32>
      %c0_59 = arith.constant 0 : index
      %c0_60 = arith.constant 0 : index
      %c0_61 = arith.constant 0 : index
      %112 = vector.load %arg8[%c0_59, %c0_60, %c0_61] : memref<2x8x128xf32, #tpu.memory_space<vmem>>, vector<2x8x128xf32>
      tpu.vector_store %arg8[%c0_59, %c0_60, %c0_61], %111 {strides = array<i32>} : memref<2x8x128xf32, #tpu.memory_space<vmem>>, vector<2x8x128xf32>,
    } else {
    }
    %c0 = arith.constant 0 : index
    %c0_1 = arith.constant 0 : index
    %c0_2 = arith.constant 0 : index
    %3 = vector.load %arg1[%c0, %c0_1, %c0_2] : memref<1x8x128xbf16, #tpu.memory_space<vmem>>, vector<1x8x128xbf16>
    %4 = vector.shape_cast %3 : vector<1x8x128xbf16> to vector<8x128xbf16>
    %c0_3 = arith.constant 0 : index
    %c0_4 = arith.constant 0 : index
    %c0_5 = arith.constant 0 : index
    %5 = vector.load %arg8[%c0_3, %c0_4, %c0_5] : memref<2x8x128xf32, #tpu.memory_space<vmem>>, vector<1x8x128xf32>
    %6 = vector.shape_cast %5 : vector<1x8x128xf32> to vector<8x128xf32>
    %c0_6 = arith.constant 0 : index
    %c0_7 = arith.constant 0 : index
    %c0_8 = arith.constant 0 : index
    %7 = vector.load %arg3[%c0_6, %c0_7, %c0_8] : memref<2x256x384xbf16, #tpu.memory_space<vmem>>, vector<1x128x384xbf16>
    %8 = vector.shape_cast %7 : vector<1x128x384xbf16> to vector<128x384xbf16>
    %cst = arith.constant dense<0.000000e+00> : vector<8x384xf32>
    %9 = tpu.matmul %4, %8, %cst {dimension_numbers = #tpu.dot_dimension_numbers<[1], [0], [0], [1], [0, 0, 1, 1], [], []>} : vector<8x128xbf16>, vector<128x384xbf16>, vector<8x384xf32> -> vector<8x384xf32>
    %c0_9 = arith.constant 0 : index
    %c0_10 = arith.constant 0 : index
    %c0_11 = arith.constant 0 : index
    %10 = vector.load %arg4[%c0_9, %c0_10, %c0_11] : memref<2x2x384xf32, #tpu.memory_space<vmem>>, vector<1x1x384xf32>
    %11 = vector.shape_cast %10 : vector<1x1x384xf32> to vector<1x384xf32>
    %12 = vector.broadcast %11 : vector<1x384xf32> to vector<8x384xf32>
    %13 = arith.addf %9, %12 : vector<8x384xf32>
    %14 = arith.truncf %6 : vector<8x128xf32> to vector<8x128xbf16>
    %c0_12 = arith.constant 0 : index
    %c128 = arith.constant 128 : index
    %c0_13 = arith.constant 0 : index
    %15 = vector.load %arg3[%c0_12, %c128, %c0_13] : memref<2x256x384xbf16, #tpu.memory_space<vmem>>, vector<1x128x384xbf16>
    %16 = vector.shape_cast %15 : vector<1x128x384xbf16> to vector<128x384xbf16>
    %cst_14 = arith.constant dense<0.000000e+00> : vector<8x384xf32>
    %17 = tpu.matmul %14, %16, %cst_14 {dimension_numbers = #tpu.dot_dimension_numbers<[1], [0], [0], [1], [0, 0, 1, 1], [], []>} : vector<8x128xbf16>, vector<128x384xbf16>, vector<8x384xf32> -> vector<8x384xf32>
    %c0_15 = arith.constant 0 : index
    %c1 = arith.constant 1 : index
    %c0_16 = arith.constant 0 : index
    %18 = vector.load %arg4[%c0_15, %c1, %c0_16] : memref<2x2x384xf32, #tpu.memory_space<vmem>>, vector<1x1x384xf32>
    %19 = vector.shape_cast %18 : vector<1x1x384xf32> to vector<1x384xf32>
    %20 = vector.broadcast %19 : vector<1x384xf32> to vector<8x384xf32>
    %21 = arith.addf %17, %20 : vector<8x384xf32>
    %22 = vector.extract_strided_slice %13 {offsets = [0, 0], sizes = [8, 128], strides = [1, 1]} : vector<8x384xf32> to vector<8x128xf32>
    %23 = vector.extract_strided_slice %21 {offsets = [0, 0], sizes = [8, 128], strides = [1, 1]} : vector<8x384xf32> to vector<8x128xf32>
    %24 = arith.addf %22, %23 : vector<8x128xf32>
    %25 = arith.negf %24 : vector<8x128xf32>
    %26 = math.exp %25 : vector<8x128xf32>
    %cst_17 = arith.constant 1.000000e+00 : f32
    %27 = vector.broadcast %cst_17 : f32 to vector<8x128xf32>
    %28 = arith.addf %27, %26 : vector<8x128xf32>
    %29 = arith.divf %27, %28 : vector<8x128xf32>
    %30 = vector.extract_strided_slice %13 {offsets = [0, 128], sizes = [8, 128], strides = [1, 1]} : vector<8x384xf32> to vector<8x128xf32>
    %31 = vector.extract_strided_slice %21 {offsets = [0, 128], sizes = [8, 128], strides = [1, 1]} : vector<8x384xf32> to vector<8x128xf32>
    %32 = arith.addf %30, %31 : vector<8x128xf32>
    %33 = arith.negf %32 : vector<8x128xf32>
    %34 = math.exp %33 : vector<8x128xf32>
    %cst_18 = arith.constant 1.000000e+00 : f32
    %35 = vector.broadcast %cst_18 : f32 to vector<8x128xf32>
    %36 = arith.addf %35, %34 : vector<8x128xf32>
    %37 = arith.divf %35, %36 : vector<8x128xf32>
    %38 = vector.extract_strided_slice %13 {offsets = [0, 256], sizes = [8, 128], strides = [1, 1]} : vector<8x384xf32> to vector<8x128xf32>
    %39 = vector.extract_strided_slice %21 {offsets = [0, 256], sizes = [8, 128], strides = [1, 1]} : vector<8x384xf32> to vector<8x128xf32>
    %40 = arith.mulf %29, %39 : vector<8x128xf32>
    %41 = arith.addf %38, %40 : vector<8x128xf32>
    %42 = math.tanh %41 : vector<8x128xf32>
    %cst_19 = arith.constant 1.000000e+00 : f32
    %43 = vector.broadcast %cst_19 : f32 to vector<8x128xf32>
    %44 = arith.subf %43, %37 : vector<8x128xf32>
    %45 = arith.mulf %44, %42 : vector<8x128xf32>
    %46 = arith.mulf %37, %6 : vector<8x128xf32>
    %47 = arith.addf %45, %46 : vector<8x128xf32>
    %c0_20 = arith.constant 0 : index
    %c0_21 = arith.constant 0 : index
    %c0_22 = arith.constant 0 : index
    %48 = vector.load %arg8[%c0_20, %c0_21, %c0_22] : memref<2x8x128xf32, #tpu.memory_space<vmem>>, vector<1x8x128xf32>
    %49 = vector.shape_cast %48 : vector<1x8x128xf32> to vector<8x128xf32>
    %50 = vector.shape_cast %47 : vector<8x128xf32> to vector<1x8x128xf32>
    tpu.vector_store %arg8[%c0_20, %c0_21, %c0_22], %50 {strides = array<i32>} : memref<2x8x128xf32, #tpu.memory_space<vmem>>, vector<1x8x128xf32>,
    %51 = arith.truncf %47 : vector<8x128xf32> to vector<8x128xbf16>
    %c1_23 = arith.constant 1 : index
    %c0_24 = arith.constant 0 : index
    %c0_25 = arith.constant 0 : index
    %52 = vector.load %arg8[%c1_23, %c0_24, %c0_25] : memref<2x8x128xf32, #tpu.memory_space<vmem>>, vector<1x8x128xf32>
    %53 = vector.shape_cast %52 : vector<1x8x128xf32> to vector<8x128xf32>
    %c1_26 = arith.constant 1 : index
    %c0_27 = arith.constant 0 : index
    %c0_28 = arith.constant 0 : index
    %54 = vector.load %arg3[%c1_26, %c0_27, %c0_28] : memref<2x256x384xbf16, #tpu.memory_space<vmem>>, vector<1x128x384xbf16>
    %55 = vector.shape_cast %54 : vector<1x128x384xbf16> to vector<128x384xbf16>
    %cst_29 = arith.constant dense<0.000000e+00> : vector<8x384xf32>
    %56 = tpu.matmul %51, %55, %cst_29 {dimension_numbers = #tpu.dot_dimension_numbers<[1], [0], [0], [1], [0, 0, 1, 1], [], []>} : vector<8x128xbf16>, vector<128x384xbf16>, vector<8x384xf32> -> vector<8x384xf32>
    %c1_30 = arith.constant 1 : index
    %c0_31 = arith.constant 0 : index
    %c0_32 = arith.constant 0 : index
    %57 = vector.load %arg4[%c1_30, %c0_31, %c0_32] : memref<2x2x384xf32, #tpu.memory_space<vmem>>, vector<1x1x384xf32>
    %58 = vector.shape_cast %57 : vector<1x1x384xf32> to vector<1x384xf32>
    %59 = vector.broadcast %58 : vector<1x384xf32> to vector<8x384xf32>
    %60 = arith.addf %56, %59 : vector<8x384xf32>
    %61 = arith.truncf %53 : vector<8x128xf32> to vector<8x128xbf16>
    %c1_33 = arith.constant 1 : index
    %c128_34 = arith.constant 128 : index
    %c0_35 = arith.constant 0 : index
    %62 = vector.load %arg3[%c1_33, %c128_34, %c0_35] : memref<2x256x384xbf16, #tpu.memory_space<vmem>>, vector<1x128x384xbf16>
    %63 = vector.shape_cast %62 : vector<1x128x384xbf16> to vector<128x384xbf16>
    %cst_36 = arith.constant dense<0.000000e+00> : vector<8x384xf32>
    %64 = tpu.matmul %61, %63, %cst_36 {dimension_numbers = #tpu.dot_dimension_numbers<[1], [0], [0], [1], [0, 0, 1, 1], [], []>} : vector<8x128xbf16>, vector<128x384xbf16>, vector<8x384xf32> -> vector<8x384xf32>
    %c1_37 = arith.constant 1 : index
    %c1_38 = arith.constant 1 : index
    %c0_39 = arith.constant 0 : index
    %65 = vector.load %arg4[%c1_37, %c1_38, %c0_39] : memref<2x2x384xf32, #tpu.memory_space<vmem>>, vector<1x1x384xf32>
    %66 = vector.shape_cast %65 : vector<1x1x384xf32> to vector<1x384xf32>
    %67 = vector.broadcast %66 : vector<1x384xf32> to vector<8x384xf32>
    %68 = arith.addf %64, %67 : vector<8x384xf32>
    %69 = vector.extract_strided_slice %60 {offsets = [0, 0], sizes = [8, 128], strides = [1, 1]} : vector<8x384xf32> to vector<8x128xf32>
    %70 = vector.extract_strided_slice %68 {offsets = [0, 0], sizes = [8, 128], strides = [1, 1]} : vector<8x384xf32> to vector<8x128xf32>
    %71 = arith.addf %69, %70 : vector<8x128xf32>
    %72 = arith.negf %71 : vector<8x128xf32>
    %73 = math.exp %72 : vector<8x128xf32>
    %cst_40 = arith.constant 1.000000e+00 : f32
    %74 = vector.broadcast %cst_40 : f32 to vector<8x128xf32>
    %75 = arith.addf %74, %73 : vector<8x128xf32>
    %76 = arith.divf %74, %75 : vector<8x128xf32>
    %77 = vector.extract_strided_slice %60 {offsets = [0, 128], sizes = [8, 128], strides = [1, 1]} : vector<8x384xf32> to vector<8x128xf32>
    %78 = vector.extract_strided_slice %68 {offsets = [0, 128], sizes = [8, 128], strides = [1, 1]} : vector<8x384xf32> to vector<8x128xf32>
    %79 = arith.addf %77, %78 : vector<8x128xf32>
    %80 = arith.negf %79 : vector<8x128xf32>
    %81 = math.exp %80 : vector<8x128xf32>
    %cst_41 = arith.constant 1.000000e+00 : f32
    %82 = vector.broadcast %cst_41 : f32 to vector<8x128xf32>
    %83 = arith.addf %82, %81 : vector<8x128xf32>
    %84 = arith.divf %82, %83 : vector<8x128xf32>
    %85 = vector.extract_strided_slice %60 {offsets = [0, 256], sizes = [8, 128], strides = [1, 1]} : vector<8x384xf32> to vector<8x128xf32>
    %86 = vector.extract_strided_slice %68 {offsets = [0, 256], sizes = [8, 128], strides = [1, 1]} : vector<8x384xf32> to vector<8x128xf32>
    %87 = arith.mulf %76, %86 : vector<8x128xf32>
    %88 = arith.addf %85, %87 : vector<8x128xf32>
    %89 = math.tanh %88 : vector<8x128xf32>
    %cst_42 = arith.constant 1.000000e+00 : f32
    %90 = vector.broadcast %cst_42 : f32 to vector<8x128xf32>
    %91 = arith.subf %90, %84 : vector<8x128xf32>
    %92 = arith.mulf %91, %89 : vector<8x128xf32>
    %93 = arith.mulf %84, %53 : vector<8x128xf32>
    %94 = arith.addf %92, %93 : vector<8x128xf32>
    %c1_43 = arith.constant 1 : index
    %c0_44 = arith.constant 0 : index
    %c0_45 = arith.constant 0 : index
    %95 = vector.load %arg8[%c1_43, %c0_44, %c0_45] : memref<2x8x128xf32, #tpu.memory_space<vmem>>, vector<1x8x128xf32>
    %96 = vector.shape_cast %95 : vector<1x8x128xf32> to vector<8x128xf32>
    %97 = vector.shape_cast %94 : vector<8x128xf32> to vector<1x8x128xf32>
    tpu.vector_store %arg8[%c1_43, %c0_44, %c0_45], %97 {strides = array<i32>} : memref<2x8x128xf32, #tpu.memory_space<vmem>>, vector<1x8x128xf32>,
    %98 = arith.truncf %94 : vector<8x128xf32> to vector<8x128xbf16>
    %c0_46 = arith.constant 0 : index
    %c0_47 = arith.constant 0 : index
    %99 = vector.load %arg5[%c0_46, %c0_47] : memref<129x128xbf16, #tpu.memory_space<vmem>>, vector<128x128xbf16>
    %cst_48 = arith.constant dense<0.000000e+00> : vector<8x128xf32>
    %100 = tpu.matmul %98, %99, %cst_48 {dimension_numbers = #tpu.dot_dimension_numbers<[1], [0], [0], [1], [0, 0, 1, 1], [], []>} : vector<8x128xbf16>, vector<128x128xbf16>, vector<8x128xf32> -> vector<8x128xf32>
    %c128_49 = arith.constant 128 : index
    %c0_50 = arith.constant 0 : index
    %101 = vector.load %arg5[%c128_49, %c0_50] : memref<129x128xbf16, #tpu.memory_space<vmem>>, vector<1x128xbf16>
    %102 = arith.extf %101 : vector<1x128xbf16> to vector<1x128xf32>
    %103 = vector.broadcast %102 : vector<1x128xf32> to vector<8x128xf32>
    %104 = arith.addf %100, %103 : vector<8x128xf32>
    %c0_51 = arith.constant 0 : index
    %c0_52 = arith.constant 0 : index
    %c0_53 = arith.constant 0 : index
    %105 = vector.load %arg6[%c0_51, %c0_52, %c0_53] : memref<1x8x128xf32, #tpu.memory_space<vmem>>, vector<1x8x128xf32>
    %106 = vector.shape_cast %105 : vector<1x8x128xf32> to vector<8x128xf32>
    %107 = vector.shape_cast %104 : vector<8x128xf32> to vector<1x8x128xf32>
    tpu.vector_store %arg6[%c0_51, %c0_52, %c0_53], %107 {strides = array<i32>} : memref<1x8x128xf32, #tpu.memory_space<vmem>>, vector<1x8x128xf32>,
    %c0_i32_54 = arith.constant 0 : i32
    %108 = arith.cmpi eq, %arg0, %c0_i32_54 : i32
    %109 = arith.extui %108 : i1 to i32
    %c0_i32_55 = arith.constant 0 : i32
    %110 = arith.cmpi ne, %109, %c0_i32_55 : i32
    scf.if %110 {
      %c0_56 = arith.constant 0 : index
      %c0_57 = arith.constant 0 : index
      %c0_58 = arith.constant 0 : index
      %111 = vector.load %arg8[%c0_56, %c0_57, %c0_58] : memref<2x8x128xf32, #tpu.memory_space<vmem>>, vector<2x8x128xf32>
      %c0_59 = arith.constant 0 : index
      %c0_60 = arith.constant 0 : index
      %c0_61 = arith.constant 0 : index
      %112 = vector.load %arg7[%c0_59, %c0_60, %c0_61] : memref<2x8x128xf32, #tpu.memory_space<vmem>>, vector<2x8x128xf32>
      tpu.vector_store %arg7[%c0_59, %c0_60, %c0_61], %111 {strides = array<i32>} : memref<2x8x128xf32, #tpu.memory_space<vmem>>, vector<2x8x128xf32>,
    } else {
    }
    return
  }
  func.func @transform_0(%arg0: i32) -> (i32, i32, i32) {
    %c0_i32 = arith.constant 0 : i32
    %c0_i32_0 = arith.constant 0 : i32
    %c0_i32_1 = arith.constant 0 : i32
    return %arg0, %c0_i32, %c0_i32_0 : i32, i32, i32
  }
  func.func @transform_1(%arg0: i32) -> (i32, i32, i32) {
    %c0_i32 = arith.constant 0 : i32
    %c0_i32_0 = arith.constant 0 : i32
    %c0_i32_1 = arith.constant 0 : i32
    %c0_i32_2 = arith.constant 0 : i32
    return %c0_i32, %c0_i32_0, %c0_i32_1 : i32, i32, i32
  }
  func.func @transform_2(%arg0: i32) -> (i32, i32, i32) {
    %c0_i32 = arith.constant 0 : i32
    %c0_i32_0 = arith.constant 0 : i32
    %c0_i32_1 = arith.constant 0 : i32
    %c0_i32_2 = arith.constant 0 : i32
    return %c0_i32, %c0_i32_0, %c0_i32_1 : i32, i32, i32
  }
  func.func @transform_3(%arg0: i32) -> (i32, i32, i32) {
    %c0_i32 = arith.constant 0 : i32
    %c0_i32_0 = arith.constant 0 : i32
    %c0_i32_1 = arith.constant 0 : i32
    %c0_i32_2 = arith.constant 0 : i32
    return %c0_i32, %c0_i32_0, %c0_i32_1 : i32, i32, i32
  }
  func.func @transform_4(%arg0: i32) -> (i32, i32) {
    %c0_i32 = arith.constant 0 : i32
    %c0_i32_0 = arith.constant 0 : i32
    %c0_i32_1 = arith.constant 0 : i32
    return %c0_i32, %c0_i32_0 : i32, i32
  }
  func.func @transform_5(%arg0: i32) -> (i32, i32, i32) {
    %c0_i32 = arith.constant 0 : i32
    %c0_i32_0 = arith.constant 0 : i32
    %c0_i32_1 = arith.constant 0 : i32
    return %arg0, %c0_i32, %c0_i32_0 : i32, i32, i32
  }
  func.func @transform_6(%arg0: i32) -> (i32, i32, i32) {
    %c0_i32 = arith.constant 0 : i32
    %c0_i32_0 = arith.constant 0 : i32
    %c0_i32_1 = arith.constant 0 : i32
    %c0_i32_2 = arith.constant 0 : i32
    return %c0_i32, %c0_i32_0, %c0_i32_1 : i32, i32, i32
  }
}

</mosaic_0001>

<llo_original>
// kernel: gru_decoder_forward.1
$region0: #{gru_decoder_forward.1}
  #allocation0 [shape = 'u32[]', space=smem, size = 0x4, offset = 0x4, fixed_abs, tag = 'smem constant byte address 0x4 - core index']
  #allocation1 [shape = 'u32[144,128]{1,0:T(1,128)}', space=vmem, size = 0x12000, scoped, tag = 'internal scratch']
  #allocation2 [shape = 'f32[2,8,128]{2,1,0:T(8,128)}', space=vmem, size = 0x2000, scoped, tag = 'scratch operand']
  %s0 = inlined_call_operand.vmem [shape: bf16[1,8,128], index: 0, kind: input, shape index: {}]
  %s1 = inlined_call_operand.vmem [shape: f32[2,8,128], index: 1, kind: input, shape index: {}]
  %s2 = inlined_call_operand.hbm [shape: bf16[2,256,384], index: 2, kind: input, shape index: {}]
  %s3 = inlined_call_operand.vmem [shape: f32[2,2,384], index: 3, kind: input, shape index: {}]
  %s4 = inlined_call_operand.hbm [shape: bf16[129,128], index: 4, kind: input, shape index: {}]
  %s5 = inlined_call_operand.hbm [shape: f32[1,8,128], index: 5, kind: output, shape index: {0}]
  %s6 = inlined_call_operand.hbm [shape: f32[2,8,128], index: 6, kind: output, shape index: {1}]
  %7 = xla_tuple %s5, %s6
  %s8 = sld [smem:[#allocation0]]
  $region54: #{gru_decoder_forward.1} parent=0
    _
  %s10 = ssub.s32 1, %s8
  %s11 = scalar_select 0, %s10, %s8
  $region1: #{gru_decoder_forward.1} parent=0
    #allocation3 [shape = 'u8[393216]{0}', space=vmem, size = 0x60000, scoped, tag = 'input window, operand 2, single buffered']
    #allocation4 [shape = 's32[1]{0}', space=sflag, size = 0x4, scoped, tag = 'scoped memory for gru_decoder_forward.1']
    #allocation5 [shape = 's32[1]{0}', space=sflag, size = 0x4, scoped, tag = 'scoped memory for gru_decoder_forward.1']
    #allocation6 [shape = 'u8[34816]{0}', space=vmem, size = 0x8800, scoped, tag = 'input window, operand 4, single buffered']
    #allocation7 [shape = 's32[1]{0}', space=sflag, size = 0x4, scoped, tag = 'scoped memory for gru_decoder_forward.1']
    #allocation8 [shape = 'u8[4096]{0}', space=vmem, size = 0x1000, scoped, tag = 'output window, operand 0, single buffered']
    #allocation9 [shape = 'u8[8192]{0}', space=vmem, size = 0x2000, scoped, tag = 'output window, operand 1, single buffered']
    #allocation10 [shape = 's32[1]{0}', space=sflag, size = 0x4, scoped, tag = 'scoped memory for gru_decoder_forward.1']
    %12 = vsyncpa [#allocation4], 0
    %13 = vsyncpa [#allocation7], 0
    %14 = vsyncpa [#allocation5], 0
    %15 = vsyncpa [#allocation10], 0
    // Predicated region
    $region2: #{gru_decoder_forward.1} parent=1 // pred_check
      _
    $region3: #{gru_decoder_forward.1} parent=1 // pred_check_branch
      %17 = sbr.rel (0) target = $region5
    $region4: #{gru_decoder_forward.1} parent=1 // pred_region
      _
    $region5: #{gru_decoder_forward.1} parent=1 // pred_fallthru
      _
    // Predicated region
    $region6: #{gru_decoder_forward.1} parent=1 // pred_check
      _
    $region7: #{gru_decoder_forward.1} parent=1 // pred_check_branch
      %19 = sbr.rel (0) target = $region9
    $region8: #{gru_decoder_forward.1} parent=1 // pred_region
      _
    $region9: #{gru_decoder_forward.1} parent=1 // pred_fallthru
      _
    // Predicated region
    $region10: #{gru_decoder_forward.1} parent=1 // pred_check
      _
    $region11: #{gru_decoder_forward.1} parent=1 // pred_check_branch
      %21 = sbr.rel (0) target = $region13
    $region12: #{gru_decoder_forward.1} parent=1 // pred_region
      %s23 = ssub.s32 12288, 12288
      %24 = vsyncadd [#allocation4], %s23
      %s25 = sshll.u32 [#allocation3], 4
      %s26 = int_to_ptr.vmem [resolvable:$true] %s25
      %31 = dma.hbm_to_vmem [thread:$0]  %s2, 12288, %s26, [#allocation4], 192, 192, 12
    $region13: #{gru_decoder_forward.1} parent=1 // pred_fallthru
      _
    // Predicated region
    $region14: #{gru_decoder_forward.1} parent=1 // pred_check
      _
    $region15: #{gru_decoder_forward.1} parent=1 // pred_check_branch
      %33 = sbr.rel (0) target = $region17
    $region16: #{gru_decoder_forward.1} parent=1 // pred_region
      _
    $region17: #{gru_decoder_forward.1} parent=1 // pred_fallthru
      _
    // Predicated region
    $region18: #{gru_decoder_forward.1} parent=1 // pred_check
      _
    $region19: #{gru_decoder_forward.1} parent=1 // pred_check_branch
      %35 = sbr.rel (0) target = $region21
    $region20: #{gru_decoder_forward.1} parent=1 // pred_region
      %s37 = ssub.s32 1088, 1088
      %38 = vsyncadd [#allocation7], %s37
      %s39 = sshll.u32 [#allocation6], 4
      %s40 = int_to_ptr.vmem [resolvable:$true] %s39
      %45 = dma.hbm_to_vmem [thread:$0]  %s4, 1088, %s40, [#allocation7], 64, 64, 4
    $region21: #{gru_decoder_forward.1} parent=1 // pred_fallthru
      _
    // Predicated region
    $region22: #{gru_decoder_forward.1} parent=1 // pred_check
      _
    $region23: #{gru_decoder_forward.1} parent=1 // pred_check_branch
      %47 = sbr.rel (0) target = $region25
    $region24: #{gru_decoder_forward.1} parent=1 // pred_region
      %48 = dma.done [#allocation4], 12288
    $region25: #{gru_decoder_forward.1} parent=1 // pred_fallthru
      _
    // Predicated region
    $region26: #{gru_decoder_forward.1} parent=1 // pred_check
      _
    $region27: #{gru_decoder_forward.1} parent=1 // pred_check_branch
      %50 = sbr.rel (0) target = $region29
    $region28: #{gru_decoder_forward.1} parent=1 // pred_region
      %51 = dma.done [#allocation7], 1088
    $region29: #{gru_decoder_forward.1} parent=1 // pred_fallthru
      _
    %p53 = scmp.eq.s32.totalorder 0, 0
    // Predicated region
    $region30: #{gru_decoder_forward.1} parent=1 // pred_check
      %p54 = pneg %p53
    $region31: #{gru_decoder_forward.1} parent=1 // pred_check_branch
      %56 = sbr.rel (%p54) target = $region33
    $region32: #{gru_decoder_forward.1} parent=1 // pred_region
      %v57 = vld [vmem:[%s1] sm:$0xff]
      %v58 = vld [vmem:[%s1 + $0x8] sm:$0xff]
      %59 = vst [vmem:[#allocation2] sm:$0xff] %v57
      %60 = vst [vmem:[#allocation2 + $0x8] sm:$0xff] %v58
    $region33: #{gru_decoder_forward.1} parent=1 // pred_fallthru
      _
    %v61 = vld [vmem:[%s0] sm:$0xf]
    %v62 = vld [vmem:[#allocation2] sm:$0xff]
    %v63 = vld [vmem:[#allocation3] sm:$0xff]
    %v64 = vld [vmem:[#allocation3 + $0x8] sm:$0xf]
    %v65 = vld [vmem:[#allocation3 + $0xc] sm:$0xff]
    %v66 = vld [vmem:[#allocation3 + $0x14] sm:$0xf]
    %v67 = vld [vmem:[#allocation3 + $0x18] sm:$0xff]
    %v68 = vld [vmem:[#allocation3 + $0x20] sm:$0xf]
    %v69 = vld [vmem:[#allocation3 + $0x24] sm:$0xff]
    %v70 = vld [vmem:[#allocation3 + $0x2c] sm:$0xf]
    %v71 = vld [vmem:[#allocation3 + $0x30] sm:$0xff]
    %v72 = vld [vmem:[#allocation3 + $0x38] sm:$0xf]
    %v73 = vld [vmem:[#allocation3 + $0x3c] sm:$0xff]
    %v74 = vld [vmem:[#allocation3 + $0x44] sm:$0xf]
    %v75 = vld [vmem:[#allocation3 + $0x48] sm:$0xff]
    %v76 = vld [vmem:[#allocation3 + $0x50] sm:$0xf]
    %v77 = vld [vmem:[#allocation3 + $0x54] sm:$0xff]
    %v78 = vld [vmem:[#allocation3 + $0x5c] sm:$0xf]
    %v79 = vld [vmem:[#allocation3 + $0x60] sm:$0xff]
    %v80 = vld [vmem:[#allocation3 + $0x68] sm:$0xf]
    %v81 = vld [vmem:[#allocation3 + $0x6c] sm:$0xff]
    %v82 = vld [vmem:[#allocation3 + $0x74] sm:$0xf]
    %v83 = vld [vmem:[#allocation3 + $0x78] sm:$0xff]
    %v84 = vld [vmem:[#allocation3 + $0x80] sm:$0xf]
    %v85 = vld [vmem:[#allocation3 + $0x84] sm:$0xff]
    %v86 = vld [vmem:[#allocation3 + $0x8c] sm:$0xf]
    %v87 = vld [vmem:[#allocation3 + $0x90] sm:$0xff]
    %v88 = vld [vmem:[#allocation3 + $0x98] sm:$0xf]
    %v89 = vld [vmem:[#allocation3 + $0x9c] sm:$0xff]
    %v90 = vld [vmem:[#allocation3 + $0xa4] sm:$0xf]
    %v91 = vld [vmem:[#allocation3 + $0xa8] sm:$0xff]
    %v92 = vld [vmem:[#allocation3 + $0xb0] sm:$0xf]
    %v93 = vld [vmem:[#allocation3 + $0xb4] sm:$0xff]
    %v94 = vld [vmem:[#allocation3 + $0xbc] sm:$0xf]
    %v95 = vld [vmem:[%s3] ss:$2 sm:$0x7]
    %v97 = vlaneseq
    %v98 = vshrl.u32 %v97, 7
    %v99 = vsub.s32 0, %v98
    %v100 = vrot.slane %v95, %v99
    %v101 = vlaneseq
    %v102 = vshrl.u32 %v101, 7
    %v103 = vsub.s32 1, %v102
    %v104 = vrot.slane %v95, %v103
    %v105 = vlaneseq
    %v106 = vshrl.u32 %v105, 7
    %v107 = vsub.s32 2, %v106
    %v108 = vrot.slane %v95, %v107
    %v144 = vunpack.c.l.b16 %v63
    %v145 = vunpack.c.h.b16 %v63
    %v146 = vunpack.c.l.b16 %v64
    %v147 = vunpack.c.l.b16 %v65
    %v148 = vunpack.c.h.b16 %v65
    %v149 = vunpack.c.l.b16 %v66
    %v150 = vunpack.c.l.b16 %v67
    %v151 = vunpack.c.h.b16 %v67
    %v152 = vunpack.c.l.b16 %v68
    %v153 = vunpack.c.l.b16 %v69
    %v154 = vunpack.c.h.b16 %v69
    %v155 = vunpack.c.l.b16 %v70
    %v156 = vunpack.c.l.b16 %v71
    %v157 = vunpack.c.h.b16 %v71
    %v158 = vunpack.c.l.b16 %v72
    %v159 = vunpack.c.l.b16 %v73
    %v160 = vunpack.c.h.b16 %v73
    %v161 = vunpack.c.l.b16 %v74
    %v162 = vunpack.c.l.b16 %v75
    %v163 = vunpack.c.h.b16 %v75
    %v164 = vunpack.c.l.b16 %v76
    %v165 = vunpack.c.l.b16 %v77
    %v166 = vunpack.c.h.b16 %v77
    %v167 = vunpack.c.l.b16 %v78
    %v168 = vunpack.c.l.b16 %v79
    %v169 = vunpack.c.h.b16 %v79
    %v170 = vunpack.c.l.b16 %v80
    %v171 = vunpack.c.l.b16 %v81
    %v172 = vunpack.c.h.b16 %v81
    %v173 = vunpack.c.l.b16 %v82
    %v174 = vunpack.c.l.b16 %v83
    %v175 = vunpack.c.h.b16 %v83
    %v176 = vunpack.c.l.b16 %v84
    %v177 = vunpack.c.l.b16 %v85
    %v178 = vunpack.c.h.b16 %v85
    %v179 = vunpack.c.l.b16 %v86
    %v180 = vunpack.c.l.b16 %v87
    %v181 = vunpack.c.h.b16 %v87
    %v182 = vunpack.c.l.b16 %v88
    %v183 = vunpack.c.l.b16 %v89
    %v184 = vunpack.c.h.b16 %v89
    %v185 = vunpack.c.l.b16 %v90
    %v186 = vunpack.c.l.b16 %v91
    %v187 = vunpack.c.h.b16 %v91
    %v188 = vunpack.c.l.b16 %v92
    %v189 = vunpack.c.l.b16 %v93
    %v190 = vunpack.c.h.b16 %v93
    %v191 = vunpack.c.l.b16 %v94
    %v192 = vpack.c.b16 %v147, %v144
    %v193 = vpack.c.b16 %v148, %v145
    %v194 = vpack.c.b16 %v149, %v146
    %v195 = vpack.c.b16 %v153, %v150
    %v196 = vpack.c.b16 %v154, %v151
    %v197 = vpack.c.b16 %v155, %v152
    %v198 = vpack.c.b16 %v159, %v156
    %v199 = vpack.c.b16 %v160, %v157
    %v200 = vpack.c.b16 %v161, %v158
    %v201 = vpack.c.b16 %v165, %v162
    %v202 = vpack.c.b16 %v166, %v163
    %v203 = vpack.c.b16 %v167, %v164
    %v204 = vpack.c.b16 %v171, %v168
    %v205 = vpack.c.b16 %v172, %v169
    %v206 = vpack.c.b16 %v173, %v170
    %v207 = vpack.c.b16 %v177, %v174
    %v208 = vpack.c.b16 %v178, %v175
    %v209 = vpack.c.b16 %v179, %v176
    %v210 = vpack.c.b16 %v183, %v180
    %v211 = vpack.c.b16 %v184, %v181
    %v212 = vpack.c.b16 %v185, %v182
    %v213 = vpack.c.b16 %v189, %v186
    %v214 = vpack.c.b16 %v190, %v187
    %v215 = vpack.c.b16 %v191, %v188
    %240 = vmatprep.subr.bf16.mxu0 %v214
    %241 = vmatpush1.bf16.msra.mxu0 %v213
    %242 = vmatprep.subr.bf16.mxu0 %v211
    %243 = vmatpush1.bf16.msra.mxu0 %v210
    %244 = vmatprep.subr.bf16.mxu0 %v208
    %245 = vmatpush1.bf16.msra.mxu0 %v207
    %246 = vmatprep.subr.bf16.mxu0 %v205
    %247 = vmatpush1.bf16.msra.mxu0 %v204
    %248 = vmatprep.subr.bf16.mxu0 %v202
    %249 = vmatpush1.bf16.msra.mxu0 %v201
    %250 = vmatprep.subr.bf16.mxu0 %v199
    %251 = vmatpush1.bf16.msra.mxu0 %v198
    %252 = vmatprep.subr.bf16.mxu0 %v196
    %253 = vmatpush1.bf16.msra.mxu0 %v195
    %254 = vmatprep.subr.bf16.mxu0 %v193
    %255 = vmatpush1.bf16.msra.mxu0 %v192
    %256 = vmatprep.subr.bf16.mxu0 0
    %257 = vmatpush2.bf16.msra.mxu0 0
    %258 = vmatprep.subr.bf16.mxu0 0
    %259 = vmatpush2.bf16.msra.mxu0 0
    %260 = vmatprep.subr.bf16.mxu0 0
    %261 = vmatpush2.bf16.msra.mxu0 0
    %262 = vmatprep.subr.bf16.mxu0 0
    %263 = vmatpush2.bf16.msra.mxu0 0
    %264 = vmatprep.subr.bf16.mxu0 0
    %265 = vmatpush2.bf16.msra.mxu0 0
    %266 = vmatprep.subr.bf16.mxu0 0
    %267 = vmatpush2.bf16.msra.mxu0 0
    %268 = vmatprep.subr.bf16.mxu0 0
    %269 = vmatpush2.bf16.msra.mxu0 0
    %270 = vmatprep.subr.bf16.mxu0 0
    %271 = vmatpush2.bf16.msra.mxu0 0
    %272 = vmatprep.mubr.bf16.mxu0 0
    %273 = vmatmul.mubr.bf16.gmra.mxu0 %v61
    %v274 = vpop.f32.mrf.mxu0
    %v275 = vadd.f32 %v100, %v274
    %v276 = vpop.f32.mrf.mxu0
    %v277 = vadd.f32 %v104, %v276
    %v278 = vpop.f32.mrf.mxu0
    %v279 = vpop.f32.mrf.mxu0
    %280 = vdwg.mxu0
    %281 = vmatprep.subr.bf16.mxu0 0
    %282 = vmatpush1.bf16.msra.mxu0 %v215
    %283 = vmatprep.subr.bf16.mxu0 0
    %284 = vmatpush1.bf16.msra.mxu0 %v212
    %285 = vmatprep.subr.bf16.mxu0 0
    %286 = vmatpush1.bf16.msra.mxu0 %v209
    %287 = vmatprep.subr.bf16.mxu0 0
    %288 = vmatpush1.bf16.msra.mxu0 %v206
    %289 = vmatprep.subr.bf16.mxu0 0
    %290 = vmatpush1.bf16.msra.mxu0 %v203
    %291 = vmatprep.subr.bf16.mxu0 0
    %292 = vmatpush1.bf16.msra.mxu0 %v200
    %293 = vmatprep.subr.bf16.mxu0 0
    %294 = vmatpush1.bf16.msra.mxu0 %v197
    %295 = vmatprep.subr.bf16.mxu0 0
    %296 = vmatpush1.bf16.msra.mxu0 %v194
    %297 = vmatprep.subr.bf16.mxu0 0
    %298 = vmatpush2.bf16.msra.mxu0 0
    %299 = vmatprep.subr.bf16.mxu0 0
    %300 = vmatpush2.bf16.msra.mxu0 0
    %301 = vmatprep.subr.bf16.mxu0 0
    %302 = vmatpush2.bf16.msra.mxu0 0
    %303 = vmatprep.subr.bf16.mxu0 0
    %304 = vmatpush2.bf16.msra.mxu0 0
    %305 = vmatprep.subr.bf16.mxu0 0
    %306 = vmatpush2.bf16.msra.mxu0 0
    %307 = vmatprep.subr.bf16.mxu0 0
    %308 = vmatpush2.bf16.msra.mxu0 0
    %309 = vmatprep.subr.bf16.mxu0 0
    %310 = vmatpush2.bf16.msra.mxu0 0
    %311 = vmatprep.subr.bf16.mxu0 0
    %312 = vmatpush2.bf16.msra.mxu0 0
    %313 = vmatprep.mubr.bf16.mxu0 0
    %314 = vmatmul.mubr.bf16.gmra.mxu0 %v61
    %v315 = vpop.f32.mrf.mxu0
    %v316 = vadd.f32 %v108, %v315
    %v317 = vpop.f32.mrf.mxu0
    %v318 = vpop.f32.mrf.mxu0
    %v319 = vpop.f32.mrf.mxu0
    %320 = vdwg.mxu0
    %v321 = vpack.c.bf16 %v62, %v62
    %v322 = vld [vmem:[#allocation3 + $0xc0] sm:$0xff]
    %v323 = vld [vmem:[#allocation3 + $0xc8] sm:$0xf]
    %v324 = vld [vmem:[#allocation3 + $0xcc] sm:$0xff]
    %v325 = vld [vmem:[#allocation3 + $0xd4] sm:$0xf]
    %v326 = vld [vmem:[#allocation3 + $0xd8] sm:$0xff]
    %v327 = vld [vmem:[#allocation3 + $0xe0] sm:$0xf]
    %v328 = vld [vmem:[#allocation3 + $0xe4] sm:$0xff]
    %v329 = vld [vmem:[#allocation3 + $0xec] sm:$0xf]
    %v330 = vld [vmem:[#allocation3 + $0xf0] sm:$0xff]
    %v331 = vld [vmem:[#allocation3 + $0xf8] sm:$0xf]
    %v332 = vld [vmem:[#allocation3 + $0xfc] sm:$0xff]
    %v333 = vld [vmem:[#allocation3 + $0x104] sm:$0xf]
    %v334 = vld [vmem:[#allocation3 + $0x108] sm:$0xff]
    %v335 = vld [vmem:[#allocation3 + $0x110] sm:$0xf]
    %v336 = vld [vmem:[#allocation3 + $0x114] sm:$0xff]
    %v337 = vld [vmem:[#allocation3 + $0x11c] sm:$0xf]
    %v338 = vld [vmem:[#allocation3 + $0x120] sm:$0xff]
    %v339 = vld [vmem:[#allocation3 + $0x128] sm:$0xf]
    %v340 = vld [vmem:[#allocation3 + $0x12c] sm:$0xff]
    %v341 = vld [vmem:[#allocation3 + $0x134] sm:$0xf]
    %v342 = vld [vmem:[#allocation3 + $0x138] sm:$0xff]
    %v343 = vld [vmem:[#allocation3 + $0x140] sm:$0xf]
    %v344 = vld [vmem:[#allocation3 + $0x144] sm:$0xff]
    %v345 = vld [vmem:[#allocation3 + $0x14c] sm:$0xf]
    %v346 = vld [vmem:[#allocation3 + $0x150] sm:$0xff]
    %v347 = vld [vmem:[#allocation3 + $0x158] sm:$0xf]
    %v348 = vld [vmem:[#allocation3 + $0x15c] sm:$0xff]
    %v349 = vld [vmem:[#allocation3 + $0x164] sm:$0xf]
    %v350 = vld [vmem:[#allocation3 + $0x168] sm:$0xff]
    %v351 = vld [vmem:[#allocation3 + $0x170] sm:$0xf]
    %v352 = vld [vmem:[#allocation3 + $0x174] sm:$0xff]
    %v353 = vld [vmem:[#allocation3 + $0x17c] sm:$0xf]
    %s354 = scalar_lea.vmem %s3, 1
    %v355 = vld [vmem:[%s354] ss:$2 sm:$0x7]
    %v357 = vlaneseq
    %v358 = vshrl.u32 %v357, 7
    %v359 = vsub.s32 0, %v358
    %v360 = vrot.slane %v355, %v359
    %v361 = vlaneseq
    %v362 = vshrl.u32 %v361, 7
    %v363 = vsub.s32 1, %v362
    %v364 = vrot.slane %v355, %v363
    %v365 = vlaneseq
    %v366 = vshrl.u32 %v365, 7
    %v367 = vsub.s32 2, %v366
    %v368 = vrot.slane %v355, %v367
    %v404 = vunpack.c.l.b16 %v322
    %v405 = vunpack.c.h.b16 %v322
    %v406 = vunpack.c.l.b16 %v323
    %v407 = vunpack.c.l.b16 %v324
    %v408 = vunpack.c.h.b16 %v324
    %v409 = vunpack.c.l.b16 %v325
    %v410 = vunpack.c.l.b16 %v326
    %v411 = vunpack.c.h.b16 %v326
    %v412 = vunpack.c.l.b16 %v327
    %v413 = vunpack.c.l.b16 %v328
    %v414 = vunpack.c.h.b16 %v328
    %v415 = vunpack.c.l.b16 %v329
    %v416 = vunpack.c.l.b16 %v330
    %v417 = vunpack.c.h.b16 %v330
    %v418 = vunpack.c.l.b16 %v331
    %v419 = vunpack.c.l.b16 %v332
    %v420 = vunpack.c.h.b16 %v332
    %v421 = vunpack.c.l.b16 %v333
    %v422 = vunpack.c.l.b16 %v334
    %v423 = vunpack.c.h.b16 %v334
    %v424 = vunpack.c.l.b16 %v335
    %v425 = vunpack.c.l.b16 %v336
    %v426 = vunpack.c.h.b16 %v336
    %v427 = vunpack.c.l.b16 %v337
    %v428 = vunpack.c.l.b16 %v338
    %v429 = vunpack.c.h.b16 %v338
    %v430 = vunpack.c.l.b16 %v339
    %v431 = vunpack.c.l.b16 %v340
    %v432 = vunpack.c.h.b16 %v340
    %v433 = vunpack.c.l.b16 %v341
    %v434 = vunpack.c.l.b16 %v342
    %v435 = vunpack.c.h.b16 %v342
    %v436 = vunpack.c.l.b16 %v343
    %v437 = vunpack.c.l.b16 %v344
    %v438 = vunpack.c.h.b16 %v344
    %v439 = vunpack.c.l.b16 %v345
    %v440 = vunpack.c.l.b16 %v346
    %v441 = vunpack.c.h.b16 %v346
    %v442 = vunpack.c.l.b16 %v347
    %v443 = vunpack.c.l.b16 %v348
    %v444 = vunpack.c.h.b16 %v348
    %v445 = vunpack.c.l.b16 %v349
    %v446 = vunpack.c.l.b16 %v350
    %v447 = vunpack.c.h.b16 %v350
    %v448 = vunpack.c.l.b16 %v351
    %v449 = vunpack.c.l.b16 %v352
    %v450 = vunpack.c.h.b16 %v352
    %v451 = vunpack.c.l.b16 %v353
    %v452 = vpack.c.b16 %v407, %v404
    %v453 = vpack.c.b16 %v408, %v405
    %v454 = vpack.c.b16 %v409, %v406
    %v455 = vpack.c.b16 %v413, %v410
    %v456 = vpack.c.b16 %v414, %v411
    %v457 = vpack.c.b16 %v415, %v412
    %v458 = vpack.c.b16 %v419, %v416
    %v459 = vpack.c.b16 %v420, %v417
    %v460 = vpack.c.b16 %v421, %v418
    %v461 = vpack.c.b16 %v425, %v422
    %v462 = vpack.c.b16 %v426, %v423
    %v463 = vpack.c.b16 %v427, %v424
    %v464 = vpack.c.b16 %v431, %v428
    %v465 = vpack.c.b16 %v432, %v429
    %v466 = vpack.c.b16 %v433, %v430
    %v467 = vpack.c.b16 %v437, %v434
    %v468 = vpack.c.b16 %v438, %v435
    %v469 = vpack.c.b16 %v439, %v436
    %v470 = vpack.c.b16 %v443, %v440
    %v471 = vpack.c.b16 %v444, %v441
    %v472 = vpack.c.b16 %v445, %v442
    %v473 = vpack.c.b16 %v449, %v446
    %v474 = vpack.c.b16 %v450, %v447
    %v475 = vpack.c.b16 %v451, %v448
    %500 = vmatprep.subr.bf16.mxu0 %v474
    %501 = vmatpush1.bf16.msra.mxu0 %v473
    %502 = vmatprep.subr.bf16.mxu0 %v471
    %503 = vmatpush1.bf16.msra.mxu0 %v470
    %504 = vmatprep.subr.bf16.mxu0 %v468
    %505 = vmatpush1.bf16.msra.mxu0 %v467
    %506 = vmatprep.subr.bf16.mxu0 %v465
    %507 = vmatpush1.bf16.msra.mxu0 %v464
    %508 = vmatprep.subr.bf16.mxu0 %v462
    %509 = vmatpush1.bf16.msra.mxu0 %v461
    %510 = vmatprep.subr.bf16.mxu0 %v459
    %511 = vmatpush1.bf16.msra.mxu0 %v458
    %512 = vmatprep.subr.bf16.mxu0 %v456
    %513 = vmatpush1.bf16.msra.mxu0 %v455
    %514 = vmatprep.subr.bf16.mxu0 %v453
    %515 = vmatpush1.bf16.msra.mxu0 %v452
    %516 = vmatprep.subr.bf16.mxu0 0
    %517 = vmatpush2.bf16.msra.mxu0 0
    %518 = vmatprep.subr.bf16.mxu0 0
    %519 = vmatpush2.bf16.msra.mxu0 0
    %520 = vmatprep.subr.bf16.mxu0 0
    %521 = vmatpush2.bf16.msra.mxu0 0
    %522 = vmatprep.subr.bf16.mxu0 0
    %523 = vmatpush2.bf16.msra.mxu0 0
    %524 = vmatprep.subr.bf16.mxu0 0
    %525 = vmatpush2.bf16.msra.mxu0 0
    %526 = vmatprep.subr.bf16.mxu0 0
    %527 = vmatpush2.bf16.msra.mxu0 0
    %528 = vmatprep.subr.bf16.mxu0 0
    %529 = vmatpush2.bf16.msra.mxu0 0
    %530 = vmatprep.subr.bf16.mxu0 0
    %531 = vmatpush2.bf16.msra.mxu0 0
    %532 = vmatprep.mubr.bf16.mxu0 0
    %533 = vmatmul.mubr.bf16.gmra.mxu0 %v321
    %v534 = vpop.f32.mrf.mxu0
    %v535 = vadd.f32 %v360, %v534
    %v536 = vpop.f32.mrf.mxu0
    %v537 = vadd.f32 %v364, %v536
    %v538 = vpop.f32.mrf.mxu0
    %v539 = vpop.f32.mrf.mxu0
    %540 = vdwg.mxu0
    %541 = vmatprep.subr.bf16.mxu0 0
    %542 = vmatpush1.bf16.msra.mxu0 %v475
    %543 = vmatprep.subr.bf16.mxu0 0
    %544 = vmatpush1.bf16.msra.mxu0 %v472
    %545 = vmatprep.subr.bf16.mxu0 0
    %546 = vmatpush1.bf16.msra.mxu0 %v469
    %547 = vmatprep.subr.bf16.mxu0 0
    %548 = vmatpush1.bf16.msra.mxu0 %v466
    %549 = vmatprep.subr.bf16.mxu0 0
    %550 = vmatpush1.bf16.msra.mxu0 %v463
    %551 = vmatprep.subr.bf16.mxu0 0
    %552 = vmatpush1.bf16.msra.mxu0 %v460
    %553 = vmatprep.subr.bf16.mxu0 0
    %554 = vmatpush1.bf16.msra.mxu0 %v457
    %555 = vmatprep.subr.bf16.mxu0 0
    %556 = vmatpush1.bf16.msra.mxu0 %v454
    %557 = vmatprep.subr.bf16.mxu0 0
    %558 = vmatpush2.bf16.msra.mxu0 0
    %559 = vmatprep.subr.bf16.mxu0 0
    %560 = vmatpush2.bf16.msra.mxu0 0
    %561 = vmatprep.subr.bf16.mxu0 0
    %562 = vmatpush2.bf16.msra.mxu0 0
    %563 = vmatprep.subr.bf16.mxu0 0
    %564 = vmatpush2.bf16.msra.mxu0 0
    %565 = vmatprep.subr.bf16.mxu0 0
    %566 = vmatpush2.bf16.msra.mxu0 0
    %567 = vmatprep.subr.bf16.mxu0 0
    %568 = vmatpush2.bf16.msra.mxu0 0
    %569 = vmatprep.subr.bf16.mxu0 0
    %570 = vmatpush2.bf16.msra.mxu0 0
    %571 = vmatprep.subr.bf16.mxu0 0
    %572 = vmatpush2.bf16.msra.mxu0 0
    %573 = vmatprep.mubr.bf16.mxu0 0
    %574 = vmatmul.mubr.bf16.gmra.mxu0 %v321
    %v575 = vpop.f32.mrf.mxu0
    %v576 = vadd.f32 %v368, %v575
    %v577 = vpop.f32.mrf.mxu0
    %v578 = vpop.f32.mrf.mxu0
    %v579 = vpop.f32.mrf.mxu0
    %580 = vdwg.mxu0
    %v581 = vadd.f32 %v275, %v535
    %v582 = vxor.u32 %v581, 2147483648
    %v583 = vmul.f32 %v582, 1.442695
    %v584 = vpow.pop %v583
    %v585 = vadd.f32 %v584, 1.0
    %v586 = vrcp.pop %v585
    %v587 = vmul.f32 1.0, %v586
    %v588 = vadd.f32 %v277, %v537
    %v589 = vxor.u32 %v588, 2147483648
    %v590 = vmul.f32 %v589, 1.442695
    %v591 = vpow.pop %v590
    %v592 = vadd.f32 %v591, 1.0
    %v593 = vrcp.pop %v592
    %v594 = vmul.f32 1.0, %v593
    %v595 = vmul.f32 %v587, %v576
    %v596 = vadd.f32 %v316, %v595
    %v597 = vtanh.pop %v596
    %v598 = vsub.f32 1.0, %v594
    %v599 = vmul.f32 %v598, %v597
    %v600 = vmul.f32 %v594, %v62
    %v601 = vadd.f32 %v599, %v600
    %602 = vst [vmem:[#allocation2] sm:$0xff] %v601
    %v603 = vpack.c.bf16 %v601, %v601
    %s604 = scalar_lea.vmem [#allocation2], 8
    %v605 = vld [vmem:[%s604] sm:$0xff]
    %s606 = scalar_lea.vmem [#allocation3], 384
    %v607 = vld [vmem:[%s606] sm:$0xff]
    %v608 = vld [vmem:[%s606 + $0x8] sm:$0xf]
    %v609 = vld [vmem:[%s606 + $0xc] sm:$0xff]
    %v610 = vld [vmem:[%s606 + $0x14] sm:$0xf]
    %v611 = vld [vmem:[%s606 + $0x18] sm:$0xff]
    %v612 = vld [vmem:[%s606 + $0x20] sm:$0xf]
    %v613 = vld [vmem:[%s606 + $0x24] sm:$0xff]
    %v614 = vld [vmem:[%s606 + $0x2c] sm:$0xf]
    %v615 = vld [vmem:[%s606 + $0x30] sm:$0xff]
    %v616 = vld [vmem:[%s606 + $0x38] sm:$0xf]
    %v617 = vld [vmem:[%s606 + $0x3c] sm:$0xff]
    %v618 = vld [vmem:[%s606 + $0x44] sm:$0xf]
    %v619 = vld [vmem:[%s606 + $0x48] sm:$0xff]
    %v620 = vld [vmem:[%s606 + $0x50] sm:$0xf]
    %v621 = vld [vmem:[%s606 + $0x54] sm:$0xff]
    %v622 = vld [vmem:[%s606 + $0x5c] sm:$0xf]
    %v623 = vld [vmem:[%s606 + $0x60] sm:$0xff]
    %v624 = vld [vmem:[%s606 + $0x68] sm:$0xf]
    %v625 = vld [vmem:[%s606 + $0x6c] sm:$0xff]
    %v626 = vld [vmem:[%s606 + $0x74] sm:$0xf]
    %v627 = vld [vmem:[%s606 + $0x78] sm:$0xff]
    %v628 = vld [vmem:[%s606 + $0x80] sm:$0xf]
    %v629 = vld [vmem:[%s606 + $0x84] sm:$0xff]
    %v630 = vld [vmem:[%s606 + $0x8c] sm:$0xf]
    %v631 = vld [vmem:[%s606 + $0x90] sm:$0xff]
    %v632 = vld [vmem:[%s606 + $0x98] sm:$0xf]
    %v633 = vld [vmem:[%s606 + $0x9c] sm:$0xff]
    %v634 = vld [vmem:[%s606 + $0xa4] sm:$0xf]
    %v635 = vld [vmem:[%s606 + $0xa8] sm:$0xff]
    %v636 = vld [vmem:[%s606 + $0xb0] sm:$0xf]
    %v637 = vld [vmem:[%s606 + $0xb4] sm:$0xff]
    %v638 = vld [vmem:[%s606 + $0xbc] sm:$0xf]
    %s639 = scalar_lea.vmem %s3, 6
    %v640 = vld [vmem:[%s639] ss:$2 sm:$0x7]
    %v642 = vlaneseq
    %v643 = vshrl.u32 %v642, 7
    %v644 = vsub.s32 0, %v643
    %v645 = vrot.slane %v640, %v644
    %v646 = vlaneseq
    %v647 = vshrl.u32 %v646, 7
    %v648 = vsub.s32 1, %v647
    %v649 = vrot.slane %v640, %v648
    %v650 = vlaneseq
    %v651 = vshrl.u32 %v650, 7
    %v652 = vsub.s32 2, %v651
    %v653 = vrot.slane %v640, %v652
    %v689 = vunpack.c.l.b16 %v607
    %v690 = vunpack.c.h.b16 %v607
    %v691 = vunpack.c.l.b16 %v608
    %v692 = vunpack.c.l.b16 %v609
    %v693 = vunpack.c.h.b16 %v609
    %v694 = vunpack.c.l.b16 %v610
    %v695 = vunpack.c.l.b16 %v611
    %v696 = vunpack.c.h.b16 %v611
    %v697 = vunpack.c.l.b16 %v612
    %v698 = vunpack.c.l.b16 %v613
    %v699 = vunpack.c.h.b16 %v613
    %v700 = vunpack.c.l.b16 %v614
    %v701 = vunpack.c.l.b16 %v615
    %v702 = vunpack.c.h.b16 %v615
    %v703 = vunpack.c.l.b16 %v616
    %v704 = vunpack.c.l.b16 %v617
    %v705 = vunpack.c.h.b16 %v617
    %v706 = vunpack.c.l.b16 %v618
    %v707 = vunpack.c.l.b16 %v619
    %v708 = vunpack.c.h.b16 %v619
    %v709 = vunpack.c.l.b16 %v620
    %v710 = vunpack.c.l.b16 %v621
    %v711 = vunpack.c.h.b16 %v621
    %v712 = vunpack.c.l.b16 %v622
    %v713 = vunpack.c.l.b16 %v623
    %v714 = vunpack.c.h.b16 %v623
    %v715 = vunpack.c.l.b16 %v624
    %v716 = vunpack.c.l.b16 %v625
    %v717 = vunpack.c.h.b16 %v625
    %v718 = vunpack.c.l.b16 %v626
    %v719 = vunpack.c.l.b16 %v627
    %v720 = vunpack.c.h.b16 %v627
    %v721 = vunpack.c.l.b16 %v628
    %v722 = vunpack.c.l.b16 %v629
    %v723 = vunpack.c.h.b16 %v629
    %v724 = vunpack.c.l.b16 %v630
    %v725 = vunpack.c.l.b16 %v631
    %v726 = vunpack.c.h.b16 %v631
    %v727 = vunpack.c.l.b16 %v632
    %v728 = vunpack.c.l.b16 %v633
    %v729 = vunpack.c.h.b16 %v633
    %v730 = vunpack.c.l.b16 %v634
    %v731 = vunpack.c.l.b16 %v635
    %v732 = vunpack.c.h.b16 %v635
    %v733 = vunpack.c.l.b16 %v636
    %v734 = vunpack.c.l.b16 %v637
    %v735 = vunpack.c.h.b16 %v637
    %v736 = vunpack.c.l.b16 %v638
    %v737 = vpack.c.b16 %v692, %v689
    %v738 = vpack.c.b16 %v693, %v690
    %v739 = vpack.c.b16 %v694, %v691
    %v740 = vpack.c.b16 %v698, %v695
    %v741 = vpack.c.b16 %v699, %v696
    %v742 = vpack.c.b16 %v700, %v697
    %v743 = vpack.c.b16 %v704, %v701
    %v744 = vpack.c.b16 %v705, %v702
    %v745 = vpack.c.b16 %v706, %v703
    %v746 = vpack.c.b16 %v710, %v707
    %v747 = vpack.c.b16 %v711, %v708
    %v748 = vpack.c.b16 %v712, %v709
    %v749 = vpack.c.b16 %v716, %v713
    %v750 = vpack.c.b16 %v717, %v714
    %v751 = vpack.c.b16 %v718, %v715
    %v752 = vpack.c.b16 %v722, %v719
    %v753 = vpack.c.b16 %v723, %v720
    %v754 = vpack.c.b16 %v724, %v721
    %v755 = vpack.c.b16 %v728, %v725
    %v756 = vpack.c.b16 %v729, %v726
    %v757 = vpack.c.b16 %v730, %v727
    %v758 = vpack.c.b16 %v734, %v731
    %v759 = vpack.c.b16 %v735, %v732
    %v760 = vpack.c.b16 %v736, %v733
    %785 = vmatprep.subr.bf16.mxu0 %v759
    %786 = vmatpush1.bf16.msra.mxu0 %v758
    %787 = vmatprep.subr.bf16.mxu0 %v756
    %788 = vmatpush1.bf16.msra.mxu0 %v755
    %789 = vmatprep.subr.bf16.mxu0 %v753
    %790 = vmatpush1.bf16.msra.mxu0 %v752
    %791 = vmatprep.subr.bf16.mxu0 %v750
    %792 = vmatpush1.bf16.msra.mxu0 %v749
    %793 = vmatprep.subr.bf16.mxu0 %v747
    %794 = vmatpush1.bf16.msra.mxu0 %v746
    %795 = vmatprep.subr.bf16.mxu0 %v744
    %796 = vmatpush1.bf16.msra.mxu0 %v743
    %797 = vmatprep.subr.bf16.mxu0 %v741
    %798 = vmatpush1.bf16.msra.mxu0 %v740
    %799 = vmatprep.subr.bf16.mxu0 %v738
    %800 = vmatpush1.bf16.msra.mxu0 %v737
    %801 = vmatprep.subr.bf16.mxu0 0
    %802 = vmatpush2.bf16.msra.mxu0 0
    %803 = vmatprep.subr.bf16.mxu0 0
    %804 = vmatpush2.bf16.msra.mxu0 0
    %805 = vmatprep.subr.bf16.mxu0 0
    %806 = vmatpush2.bf16.msra.mxu0 0
    %807 = vmatprep.subr.bf16.mxu0 0
    %808 = vmatpush2.bf16.msra.mxu0 0
    %809 = vmatprep.subr.bf16.mxu0 0
    %810 = vmatpush2.bf16.msra.mxu0 0
    %811 = vmatprep.subr.bf16.mxu0 0
    %812 = vmatpush2.bf16.msra.mxu0 0
    %813 = vmatprep.subr.bf16.mxu0 0
    %814 = vmatpush2.bf16.msra.mxu0 0
    %815 = vmatprep.subr.bf16.mxu0 0
    %816 = vmatpush2.bf16.msra.mxu0 0
    %817 = vmatprep.mubr.bf16.mxu0 0
    %818 = vmatmul.mubr.bf16.gmra.mxu0 %v603
    %v819 = vpop.f32.mrf.mxu0
    %v820 = vadd.f32 %v645, %v819
    %v821 = vpop.f32.mrf.mxu0
    %v822 = vadd.f32 %v649, %v821
    %v823 = vpop.f32.mrf.mxu0
    %v824 = vpop.f32.mrf.mxu0
    %825 = vdwg.mxu0
    %826 = vmatprep.subr.bf16.mxu0 0
    %827 = vmatpush1.bf16.msra.mxu0 %v760
    %828 = vmatprep.subr.bf16.mxu0 0
    %829 = vmatpush1.bf16.msra.mxu0 %v757
    %830 = vmatprep.subr.bf16.mxu0 0
    %831 = vmatpush1.bf16.msra.mxu0 %v754
    %832 = vmatprep.subr.bf16.mxu0 0
    %833 = vmatpush1.bf16.msra.mxu0 %v751
    %834 = vmatprep.subr.bf16.mxu0 0
    %835 = vmatpush1.bf16.msra.mxu0 %v748
    %836 = vmatprep.subr.bf16.mxu0 0
    %837 = vmatpush1.bf16.msra.mxu0 %v745
    %838 = vmatprep.subr.bf16.mxu0 0
    %839 = vmatpush1.bf16.msra.mxu0 %v742
    %840 = vmatprep.subr.bf16.mxu0 0
    %841 = vmatpush1.bf16.msra.mxu0 %v739
    %842 = vmatprep.subr.bf16.mxu0 0
    %843 = vmatpush2.bf16.msra.mxu0 0
    %844 = vmatprep.subr.bf16.mxu0 0
    %845 = vmatpush2.bf16.msra.mxu0 0
    %846 = vmatprep.subr.bf16.mxu0 0
    %847 = vmatpush2.bf16.msra.mxu0 0
    %848 = vmatprep.subr.bf16.mxu0 0
    %849 = vmatpush2.bf16.msra.mxu0 0
    %850 = vmatprep.subr.bf16.mxu0 0
    %851 = vmatpush2.bf16.msra.mxu0 0
    %852 = vmatprep.subr.bf16.mxu0 0
    %853 = vmatpush2.bf16.msra.mxu0 0
    %854 = vmatprep.subr.bf16.mxu0 0
    %855 = vmatpush2.bf16.msra.mxu0 0
    %856 = vmatprep.subr.bf16.mxu0 0
    %857 = vmatpush2.bf16.msra.mxu0 0
    %858 = vmatprep.mubr.bf16.mxu0 0
    %859 = vmatmul.mubr.bf16.gmra.mxu0 %v603
    %v860 = vpop.f32.mrf.mxu0
    %v861 = vadd.f32 %v653, %v860
    %v862 = vpop.f32.mrf.mxu0
    %v863 = vpop.f32.mrf.mxu0
    %v864 = vpop.f32.mrf.mxu0
    %865 = vdwg.mxu0
    %v866 = vpack.c.bf16 %v605, %v605
    %v867 = vld [vmem:[%s606 + $0xc0] sm:$0xff]
    %v868 = vld [vmem:[%s606 + $0xc8] sm:$0xf]
    %v869 = vld [vmem:[%s606 + $0xcc] sm:$0xff]
    %v870 = vld [vmem:[%s606 + $0xd4] sm:$0xf]
    %v871 = vld [vmem:[%s606 + $0xd8] sm:$0xff]
    %v872 = vld [vmem:[%s606 + $0xe0] sm:$0xf]
    %v873 = vld [vmem:[%s606 + $0xe4] sm:$0xff]
    %v874 = vld [vmem:[%s606 + $0xec] sm:$0xf]
    %v875 = vld [vmem:[%s606 + $0xf0] sm:$0xff]
    %v876 = vld [vmem:[%s606 + $0xf8] sm:$0xf]
    %v877 = vld [vmem:[%s606 + $0xfc] sm:$0xff]
    %v878 = vld [vmem:[%s606 + $0x104] sm:$0xf]
    %v879 = vld [vmem:[%s606 + $0x108] sm:$0xff]
    %v880 = vld [vmem:[%s606 + $0x110] sm:$0xf]
    %v881 = vld [vmem:[%s606 + $0x114] sm:$0xff]
    %v882 = vld [vmem:[%s606 + $0x11c] sm:$0xf]
    %v883 = vld [vmem:[%s606 + $0x120] sm:$0xff]
    %v884 = vld [vmem:[%s606 + $0x128] sm:$0xf]
    %v885 = vld [vmem:[%s606 + $0x12c] sm:$0xff]
    %v886 = vld [vmem:[%s606 + $0x134] sm:$0xf]
    %v887 = vld [vmem:[%s606 + $0x138] sm:$0xff]
    %v888 = vld [vmem:[%s606 + $0x140] sm:$0xf]
    %v889 = vld [vmem:[%s606 + $0x144] sm:$0xff]
    %v890 = vld [vmem:[%s606 + $0x14c] sm:$0xf]
    %v891 = vld [vmem:[%s606 + $0x150] sm:$0xff]
    %v892 = vld [vmem:[%s606 + $0x158] sm:$0xf]
    %v893 = vld [vmem:[%s606 + $0x15c] sm:$0xff]
    %v894 = vld [vmem:[%s606 + $0x164] sm:$0xf]
    %v895 = vld [vmem:[%s606 + $0x168] sm:$0xff]
    %v896 = vld [vmem:[%s606 + $0x170] sm:$0xf]
    %v897 = vld [vmem:[%s606 + $0x174] sm:$0xff]
    %v898 = vld [vmem:[%s606 + $0x17c] sm:$0xf]
    %s899 = scalar_lea.vmem %s639, 1
    %v900 = vld [vmem:[%s899] ss:$2 sm:$0x7]
    %v902 = vlaneseq
    %v903 = vshrl.u32 %v902, 7
    %v904 = vsub.s32 0, %v903
    %v905 = vrot.slane %v900, %v904
    %v906 = vlaneseq
    %v907 = vshrl.u32 %v906, 7
    %v908 = vsub.s32 1, %v907
    %v909 = vrot.slane %v900, %v908
    %v910 = vlaneseq
    %v911 = vshrl.u32 %v910, 7
    %v912 = vsub.s32 2, %v911
    %v913 = vrot.slane %v900, %v912
    %v949 = vunpack.c.l.b16 %v867
    %v950 = vunpack.c.h.b16 %v867
    %v951 = vunpack.c.l.b16 %v868
    %v952 = vunpack.c.l.b16 %v869
    %v953 = vunpack.c.h.b16 %v869
    %v954 = vunpack.c.l.b16 %v870
    %v955 = vunpack.c.l.b16 %v871
    %v956 = vunpack.c.h.b16 %v871
    %v957 = vunpack.c.l.b16 %v872
    %v958 = vunpack.c.l.b16 %v873
    %v959 = vunpack.c.h.b16 %v873
    %v960 = vunpack.c.l.b16 %v874
    %v961 = vunpack.c.l.b16 %v875
    %v962 = vunpack.c.h.b16 %v875
    %v963 = vunpack.c.l.b16 %v876
    %v964 = vunpack.c.l.b16 %v877
    %v965 = vunpack.c.h.b16 %v877
    %v966 = vunpack.c.l.b16 %v878
    %v967 = vunpack.c.l.b16 %v879
    %v968 = vunpack.c.h.b16 %v879
    %v969 = vunpack.c.l.b16 %v880
    %v970 = vunpack.c.l.b16 %v881
    %v971 = vunpack.c.h.b16 %v881
    %v972 = vunpack.c.l.b16 %v882
    %v973 = vunpack.c.l.b16 %v883
    %v974 = vunpack.c.h.b16 %v883
    %v975 = vunpack.c.l.b16 %v884
    %v976 = vunpack.c.l.b16 %v885
    %v977 = vunpack.c.h.b16 %v885
    %v978 = vunpack.c.l.b16 %v886
    %v979 = vunpack.c.l.b16 %v887
    %v980 = vunpack.c.h.b16 %v887
    %v981 = vunpack.c.l.b16 %v888
    %v982 = vunpack.c.l.b16 %v889
    %v983 = vunpack.c.h.b16 %v889
    %v984 = vunpack.c.l.b16 %v890
    %v985 = vunpack.c.l.b16 %v891
    %v986 = vunpack.c.h.b16 %v891
    %v987 = vunpack.c.l.b16 %v892
    %v988 = vunpack.c.l.b16 %v893
    %v989 = vunpack.c.h.b16 %v893
    %v990 = vunpack.c.l.b16 %v894
    %v991 = vunpack.c.l.b16 %v895
    %v992 = vunpack.c.h.b16 %v895
    %v993 = vunpack.c.l.b16 %v896
    %v994 = vunpack.c.l.b16 %v897
    %v995 = vunpack.c.h.b16 %v897
    %v996 = vunpack.c.l.b16 %v898
    %v997 = vpack.c.b16 %v952, %v949
    %v998 = vpack.c.b16 %v953, %v950
    %v999 = vpack.c.b16 %v954, %v951
    %v1000 = vpack.c.b16 %v958, %v955
    %v1001 = vpack.c.b16 %v959, %v956
    %v1002 = vpack.c.b16 %v960, %v957
    %v1003 = vpack.c.b16 %v964, %v961
    %v1004 = vpack.c.b16 %v965, %v962
    %v1005 = vpack.c.b16 %v966, %v963
    %v1006 = vpack.c.b16 %v970, %v967
    %v1007 = vpack.c.b16 %v971, %v968
    %v1008 = vpack.c.b16 %v972, %v969
    %v1009 = vpack.c.b16 %v976, %v973
    %v1010 = vpack.c.b16 %v977, %v974
    %v1011 = vpack.c.b16 %v978, %v975
    %v1012 = vpack.c.b16 %v982, %v979
    %v1013 = vpack.c.b16 %v983, %v980
    %v1014 = vpack.c.b16 %v984, %v981
    %v1015 = vpack.c.b16 %v988, %v985
    %v1016 = vpack.c.b16 %v989, %v986
    %v1017 = vpack.c.b16 %v990, %v987
    %v1018 = vpack.c.b16 %v994, %v991
    %v1019 = vpack.c.b16 %v995, %v992
    %v1020 = vpack.c.b16 %v996, %v993
    %1045 = vmatprep.subr.bf16.mxu0 %v1019
    %1046 = vmatpush1.bf16.msra.mxu0 %v1018
    %1047 = vmatprep.subr.bf16.mxu0 %v1016
    %1048 = vmatpush1.bf16.msra.mxu0 %v1015
    %1049 = vmatprep.subr.bf16.mxu0 %v1013
    %1050 = vmatpush1.bf16.msra.mxu0 %v1012
    %1051 = vmatprep.subr.bf16.mxu0 %v1010
    %1052 = vmatpush1.bf16.msra.mxu0 %v1009
    %1053 = vmatprep.subr.bf16.mxu0 %v1007
    %1054 = vmatpush1.bf16.msra.mxu0 %v1006
    %1055 = vmatprep.subr.bf16.mxu0 %v1004
    %1056 = vmatpush1.bf16.msra.mxu0 %v1003
    %1057 = vmatprep.subr.bf16.mxu0 %v1001
    %1058 = vmatpush1.bf16.msra.mxu0 %v1000
    %1059 = vmatprep.subr.bf16.mxu0 %v998
    %1060 = vmatpush1.bf16.msra.mxu0 %v997
    %1061 = vmatprep.subr.bf16.mxu0 0
    %1062 = vmatpush2.bf16.msra.mxu0 0
    %1063 = vmatprep.subr.bf16.mxu0 0
    %1064 = vmatpush2.bf16.msra.mxu0 0
    %1065 = vmatprep.subr.bf16.mxu0 0
    %1066 = vmatpush2.bf16.msra.mxu0 0
    %1067 = vmatprep.subr.bf16.mxu0 0
    %1068 = vmatpush2.bf16.msra.mxu0 0
    %1069 = vmatprep.subr.bf16.mxu0 0
    %1070 = vmatpush2.bf16.msra.mxu0 0
    %1071 = vmatprep.subr.bf16.mxu0 0
    %1072 = vmatpush2.bf16.msra.mxu0 0
    %1073 = vmatprep.subr.bf16.mxu0 0
    %1074 = vmatpush2.bf16.msra.mxu0 0
    %1075 = vmatprep.subr.bf16.mxu0 0
    %1076 = vmatpush2.bf16.msra.mxu0 0
    %1077 = vmatprep.mubr.bf16.mxu0 0
    %1078 = vmatmul.mubr.bf16.gmra.mxu0 %v866
    %v1079 = vpop.f32.mrf.mxu0
    %v1080 = vadd.f32 %v905, %v1079
    %v1081 = vpop.f32.mrf.mxu0
    %v1082 = vadd.f32 %v909, %v1081
    %v1083 = vpop.f32.mrf.mxu0
    %v1084 = vpop.f32.mrf.mxu0
    %1085 = vdwg.mxu0
    %1086 = vmatprep.subr.bf16.mxu0 0
    %1087 = vmatpush1.bf16.msra.mxu0 %v1020
    %1088 = vmatprep.subr.bf16.mxu0 0
    %1089 = vmatpush1.bf16.msra.mxu0 %v1017
    %1090 = vmatprep.subr.bf16.mxu0 0
    %1091 = vmatpush1.bf16.msra.mxu0 %v1014
    %1092 = vmatprep.subr.bf16.mxu0 0
    %1093 = vmatpush1.bf16.msra.mxu0 %v1011
    %1094 = vmatprep.subr.bf16.mxu0 0
    %1095 = vmatpush1.bf16.msra.mxu0 %v1008
    %1096 = vmatprep.subr.bf16.mxu0 0
    %1097 = vmatpush1.bf16.msra.mxu0 %v1005
    %1098 = vmatprep.subr.bf16.mxu0 0
    %1099 = vmatpush1.bf16.msra.mxu0 %v1002
    %1100 = vmatprep.subr.bf16.mxu0 0
    %1101 = vmatpush1.bf16.msra.mxu0 %v999
    %1102 = vmatprep.subr.bf16.mxu0 0
    %1103 = vmatpush2.bf16.msra.mxu0 0
    %1104 = vmatprep.subr.bf16.mxu0 0
    %1105 = vmatpush2.bf16.msra.mxu0 0
    %1106 = vmatprep.subr.bf16.mxu0 0
    %1107 = vmatpush2.bf16.msra.mxu0 0
    %1108 = vmatprep.subr.bf16.mxu0 0
    %1109 = vmatpush2.bf16.msra.mxu0 0
    %1110 = vmatprep.subr.bf16.mxu0 0
    %1111 = vmatpush2.bf16.msra.mxu0 0
    %1112 = vmatprep.subr.bf16.mxu0 0
    %1113 = vmatpush2.bf16.msra.mxu0 0
    %1114 = vmatprep.subr.bf16.mxu0 0
    %1115 = vmatpush2.bf16.msra.mxu0 0
    %1116 = vmatprep.subr.bf16.mxu0 0
    %1117 = vmatpush2.bf16.msra.mxu0 0
    %1118 = vmatprep.mubr.bf16.mxu0 0
    %1119 = vmatmul.mubr.bf16.gmra.mxu0 %v866
    %v1120 = vpop.f32.mrf.mxu0
    %v1121 = vadd.f32 %v913, %v1120
    %v1122 = vpop.f32.mrf.mxu0
    %v1123 = vpop.f32.mrf.mxu0
    %v1124 = vpop.f32.mrf.mxu0
    %1125 = vdwg.mxu0
    %v1126 = vadd.f32 %v820, %v1080
    %v1127 = vxor.u32 %v1126, 2147483648
    %v1128 = vmul.f32 %v1127, 1.442695
    %v1129 = vpow.pop %v1128
    %v1130 = vadd.f32 %v1129, 1.0
    %v1131 = vrcp.pop %v1130
    %v1132 = vmul.f32 1.0, %v1131
    %v1133 = vadd.f32 %v822, %v1082
    %v1134 = vxor.u32 %v1133, 2147483648
    %v1135 = vmul.f32 %v1134, 1.442695
    %v1136 = vpow.pop %v1135
    %v1137 = vadd.f32 %v1136, 1.0
    %v1138 = vrcp.pop %v1137
    %v1139 = vmul.f32 1.0, %v1138
    %v1140 = vmul.f32 %v1132, %v1121
    %v1141 = vadd.f32 %v861, %v1140
    %v1142 = vtanh.pop %v1141
    %v1143 = vsub.f32 1.0, %v1139
    %v1144 = vmul.f32 %v1143, %v1142
    %v1145 = vmul.f32 %v1139, %v605
    %v1146 = vadd.f32 %v1144, %v1145
    %1147 = vst [vmem:[%s604] sm:$0xff] %v1146
    %v1148 = vpack.c.bf16 %v1146, %v1146
    %v1149 = vld [vmem:[#allocation6] sm:$0xf]
    %v1150 = vld [vmem:[#allocation6 + $0x4] sm:$0xf]
    %v1151 = vld [vmem:[#allocation6 + $0x8] sm:$0xf]
    %v1152 = vld [vmem:[#allocation6 + $0xc] sm:$0xf]
    %v1153 = vld [vmem:[#allocation6 + $0x10] sm:$0xf]
    %v1154 = vld [vmem:[#allocation6 + $0x14] sm:$0xf]
    %v1155 = vld [vmem:[#allocation6 + $0x18] sm:$0xf]
    %v1156 = vld [vmem:[#allocation6 + $0x1c] sm:$0xf]
    %v1157 = vld [vmem:[#allocation6 + $0x20] sm:$0xf]
    %v1158 = vld [vmem:[#allocation6 + $0x24] sm:$0xf]
    %v1159 = vld [vmem:[#allocation6 + $0x28] sm:$0xf]
    %v1160 = vld [vmem:[#allocation6 + $0x2c] sm:$0xf]
    %v1161 = vld [vmem:[#allocation6 + $0x30] sm:$0xf]
    %v1162 = vld [vmem:[#allocation6 + $0x34] sm:$0xf]
    %v1163 = vld [vmem:[#allocation6 + $0x38] sm:$0xf]
    %v1164 = vld [vmem:[#allocation6 + $0x3c] sm:$0xf]
    %v1165 = vld [vmem:[#allocation6 + $0x40] sm:$0x1]
    %v1166 = vunpack.c.l.bf16 %v1165
    %v1167 = vlaneseq
    %v1168 = vshrl.u32 %v1167, 7
    %v1169 = vsub.s32 0, %v1168
    %v1170 = vrot.slane %v1166, %v1169
    %v1187 = vunpack.c.l.b16 %v1149
    %v1188 = vunpack.c.l.b16 %v1150
    %v1189 = vunpack.c.l.b16 %v1151
    %v1190 = vunpack.c.l.b16 %v1152
    %v1191 = vunpack.c.l.b16 %v1153
    %v1192 = vunpack.c.l.b16 %v1154
    %v1193 = vunpack.c.l.b16 %v1155
    %v1194 = vunpack.c.l.b16 %v1156
    %v1195 = vunpack.c.l.b16 %v1157
    %v1196 = vunpack.c.l.b16 %v1158
    %v1197 = vunpack.c.l.b16 %v1159
    %v1198 = vunpack.c.l.b16 %v1160
    %v1199 = vunpack.c.l.b16 %v1161
    %v1200 = vunpack.c.l.b16 %v1162
    %v1201 = vunpack.c.l.b16 %v1163
    %v1202 = vunpack.c.l.b16 %v1164
    %v1203 = vpack.c.b16 %v1188, %v1187
    %v1204 = vpack.c.b16 %v1190, %v1189
    %v1205 = vpack.c.b16 %v1192, %v1191
    %v1206 = vpack.c.b16 %v1194, %v1193
    %v1207 = vpack.c.b16 %v1196, %v1195
    %v1208 = vpack.c.b16 %v1198, %v1197
    %v1209 = vpack.c.b16 %v1200, %v1199
    %v1210 = vpack.c.b16 %v1202, %v1201
    %1219 = vmatprep.subr.bf16.mxu0 0
    %1220 = vmatpush1.bf16.msra.mxu0 %v1210
    %1221 = vmatprep.subr.bf16.mxu0 0
    %1222 = vmatpush1.bf16.msra.mxu0 %v1209
    %1223 = vmatprep.subr.bf16.mxu0 0
    %1224 = vmatpush1.bf16.msra.mxu0 %v1208
    %1225 = vmatprep.subr.bf16.mxu0 0
    %1226 = vmatpush1.bf16.msra.mxu0 %v1207
    %1227 = vmatprep.subr.bf16.mxu0 0
    %1228 = vmatpush1.bf16.msra.mxu0 %v1206
    %1229 = vmatprep.subr.bf16.mxu0 0
    %1230 = vmatpush1.bf16.msra.mxu0 %v1205
    %1231 = vmatprep.subr.bf16.mxu0 0
    %1232 = vmatpush1.bf16.msra.mxu0 %v1204
    %1233 = vmatprep.subr.bf16.mxu0 0
    %1234 = vmatpush1.bf16.msra.mxu0 %v1203
    %1235 = vmatprep.subr.bf16.mxu0 0
    %1236 = vmatpush2.bf16.msra.mxu0 0
    %1237 = vmatprep.subr.bf16.mxu0 0
    %1238 = vmatpush2.bf16.msra.mxu0 0
    %1239 = vmatprep.subr.bf16.mxu0 0
    %1240 = vmatpush2.bf16.msra.mxu0 0
    %1241 = vmatprep.subr.bf16.mxu0 0
    %1242 = vmatpush2.bf16.msra.mxu0 0
    %1243 = vmatprep.subr.bf16.mxu0 0
    %1244 = vmatpush2.bf16.msra.mxu0 0
    %1245 = vmatprep.subr.bf16.mxu0 0
    %1246 = vmatpush2.bf16.msra.mxu0 0
    %1247 = vmatprep.subr.bf16.mxu0 0
    %1248 = vmatpush2.bf16.msra.mxu0 0
    %1249 = vmatprep.subr.bf16.mxu0 0
    %1250 = vmatpush2.bf16.msra.mxu0 0
    %1251 = vmatprep.mubr.bf16.mxu0 0
    %1252 = vmatmul.mubr.bf16.gmra.mxu0 %v1148
    %v1253 = vpop.f32.mrf.mxu0
    %v1254 = vadd.f32 %v1170, %v1253
    %v1255 = vpop.f32.mrf.mxu0
    %v1256 = vpop.f32.mrf.mxu0
    %v1257 = vpop.f32.mrf.mxu0
    %1258 = vdwg.mxu0
    %1259 = vst [vmem:[#allocation8] sm:$0xff] %v1254
    // Predicated region
    $region34: #{gru_decoder_forward.1} parent=1 // pred_check
      %p1260 = pneg %p53
    $region35: #{gru_decoder_forward.1} parent=1 // pred_check_branch
      %1262 = sbr.rel (%p1260) target = $region37
    $region36: #{gru_decoder_forward.1} parent=1 // pred_region
      %v1263 = vld [vmem:[#allocation2] sm:$0xff]
      %v1264 = vld [vmem:[#allocation2 + $0x8] sm:$0xff]
      %1265 = vst [vmem:[#allocation9] sm:$0xff] %v1263
      %1266 = vst [vmem:[#allocation9 + $0x8] sm:$0xff] %v1264
    $region37: #{gru_decoder_forward.1} parent=1 // pred_fallthru
      _
    // Predicated region
    $region38: #{gru_decoder_forward.1} parent=1 // pred_check
      _
    $region39: #{gru_decoder_forward.1} parent=1 // pred_check_branch
      %1268 = sbr.rel (0) target = $region41
    $region40: #{gru_decoder_forward.1} parent=1 // pred_region
      %s1270 = ssub.s32 128, 128
      %1271 = vsyncadd [#allocation5], %s1270
      %s1273 = sshll.u32 [#allocation8], 4
      %s1274 = int_to_ptr.vmem [resolvable:$true] %s1273
      %1276 = dma.vmem_to_hbm [thread:$0]  %s1274, 128, %s5, [#allocation5]
    $region41: #{gru_decoder_forward.1} parent=1 // pred_fallthru
      _
    // Predicated region
    $region42: #{gru_decoder_forward.1} parent=1 // pred_check
      _
    $region43: #{gru_decoder_forward.1} parent=1 // pred_check_branch
      %1278 = sbr.rel (0) target = $region45
    $region44: #{gru_decoder_forward.1} parent=1 // pred_region
      %s1280 = ssub.s32 256, 256
      %1281 = vsyncadd [#allocation10], %s1280
      %s1282 = sshll.u32 [#allocation9], 4
      %s1283 = int_to_ptr.vmem [resolvable:$true] %s1282
      %1288 = dma.vmem_to_hbm [thread:$0]  %s1283, 256, %s6, [#allocation10], 128, 128, 8
    $region45: #{gru_decoder_forward.1} parent=1 // pred_fallthru
      _
    // Predicated region
    $region46: #{gru_decoder_forward.1} parent=1 // pred_check
      _
    $region47: #{gru_decoder_forward.1} parent=1 // pred_check_branch
      %1290 = sbr.rel (0) target = $region49
    $region48: #{gru_decoder_forward.1} parent=1 // pred_region
      %1291 = dma.done [#allocation5], 128
    $region49: #{gru_decoder_forward.1} parent=1 // pred_fallthru
      _
    // Predicated region
    $region50: #{gru_decoder_forward.1} parent=1 // pred_check
      _
    $region51: #{gru_decoder_forward.1} parent=1 // pred_check_branch
      %1293 = sbr.rel (0) target = $region53
    $region52: #{gru_decoder_forward.1} parent=1 // pred_region
      %1294 = dma.done [#allocation10], 256
    $region53: #{gru_decoder_forward.1} parent=1 // pred_fallthru
      _
    %1295 = vsyncpa [#allocation4], 1
    %1296 = vsyncpa [#allocation7], 1
    %1297 = vsyncpa [#allocation5], 1
    %1298 = vsyncpa [#allocation10], 1

</llo_original>
